<compile_context>
chip_gen: v7x
topology: tpu7x:2x2x1
jax: 0.10.0
libtpu: 0.0.40
codegen_flags: <defaults>
</compile_context>

<pallas_src>
import functools
import math

import jax
import jax.numpy as jnp
from jax import lax
from jax.experimental import pallas as pl
from jax.experimental.pallas import tpu as pltpu


def _round_up(x, m):
    return -(-x // m) * m


def _choose_tiles(S):
    """Return (padded sequence length, query tile)."""
    if S <= 512:
        s_pad = _round_up(S, 8)          # one full-sequence query tile
        return s_pad, s_pad
    s_pad = _round_up(S, 256)            # bounded tail padding, MXU-friendly tiles
    tq = 512 if s_pad % 512 == 0 else 256
    return s_pad, tq


def _vmem_limit_bytes(s_pad, tq, D, H, d_k, c_itemsize):
    """Rough VMEM footprint (lane/sublane padded) + headroom."""
    lane, sub, f32 = 128, 8, 4
    d_l = _round_up(D, lane)
    dk_l = _round_up(d_k, lane)
    s_sub = _round_up(s_pad, sub)
    tq_sub = _round_up(tq, sub)
    q_io = 2 * tq_sub * d_l * c_itemsize + 2 * tq_sub * d_l * f32   # q / out tiles (double buffered)
    kv_raw = 2 * s_sub * d_l * c_itemsize                           # raw k, v (Buffered(1))
    weights = d_l * d_l * c_itemsize + H * _round_up(d_k, sub) * d_l * c_itemsize \
        + 2 * sub * d_l * f32
    scratch = 2 * H * s_sub * dk_l * c_itemsize                     # projected K/V (head-major)
    transient = 2 * s_sub * d_l * f32 \
        + tq_sub * _round_up(s_pad, lane) * f32 \
        + 4 * tq_sub * d_l * f32
    total = q_io + kv_raw + weights + scratch + transient
    return int(min(96 * 2**20, max(32 * 2**20, int(total * 1.4))))


def _mha_fused_kernel(q_ref, k_ref, v_ref, wq_ref, bq_ref, wout_ref, bout_ref,
                      o_ref, nk_sc, nv_sc, *, n_heads, d_k, s_valid, s_total,
                      cdt, approx_recip):
    # q_ref:    (1, TQ, D)      query rows for this tile (compute dtype)
    # k_ref:    (1, S_pad, D)   full keys for this batch (compute dtype)
    # v_ref:    (1, S_pad, D)   full values for this batch (compute dtype)
    # wq_ref:   (D, D)          stacked all-head q_linear weights (compute dtype)
    # bq_ref:   (1, D)          stacked all-head q_linear bias (f32)
    # wout_ref: (H, d_k, D)     output projection, head-major rows (compute dtype)
    # bout_ref: (1, D)          output projection bias (f32)
    # o_ref:    (1, TQ, D)      lane-dense f32 output rows
    # nk_sc/nv_sc: (H, S_pad, d_k) projected K / V, head-major, once per batch
    qi = pl.program_id(1)
    wq = wq_ref[...]
    bq = bq_ref[...]

    # Project k and v once per batch (query-tile axis is sequential) with one
    # lane-dense (S,D)@(D,D) matmul each, then scatter into head-major scratch
    # so the per-tile head loop never lane-slices the big operands.
    # Reference bug preserved: q_linear applied to k and v.
    @pl.when(qi == 0)
    def _():
        nk = jnp.dot(k_ref[0], wq, preferred_element_type=jnp.float32) + bq
        nv = jnp.dot(v_ref[0], wq, preferred_element_type=jnp.float32) + bq
        for h in range(n_heads):
            lo = h * d_k
            nk_sc[h] = nk[:, lo:lo + d_k].astype(cdt)
            nv_sc[h] = nv[:, lo:lo + d_k].astype(cdt)

    # One lane-dense projection covering all heads; fold 1/sqrt(d_k) into q.
    nq = jnp.dot(q_ref[0], wq, preferred_element_type=jnp.float32) + bq
    nq = nq * jnp.float32(1.0 / math.sqrt(d_k))

    if s_valid != s_total:  # static: mask padded key columns
        key_valid = lax.broadcasted_iota(jnp.int32, (1, s_total), 1) < s_valid

    acc = None
    for h in range(n_heads):                 # static unroll over heads
        lo = h * d_k
        qh = nq[:, lo:lo + d_k].astype(cdt)  # (TQ, d_k) -- small per-tile slice
        kh = nk_sc[h]                        # (S_pad, d_k)
        vh = nv_sc[h]                        # (S_pad, d_k)
        # Scores via dot_general contracting last dims -- no materialized kh.T.
        s = lax.dot_general(qh, kh, (((1,), (1,)), ((), ())),
                            preferred_element_type=jnp.float32)   # (TQ, S_pad) f32
        if s_valid != s_total:
            s = jnp.where(key_valid, s, jnp.float32(-1e30))
        s = s - jnp.max(s, axis=-1, keepdims=True)
        p = jnp.exp(s)
        denom = jnp.sum(p, axis=-1, keepdims=True)                 # (TQ, 1) f32
        ho = jnp.dot(p.astype(cdt), vh,
                     preferred_element_type=jnp.float32)           # (TQ, d_k) f32
        # Deferred softmax normalization on the small (TQ, d_k) tensor.
        ho = ho * pl.reciprocal(denom, approx=approx_recip)
        # Per-head output projection accumulation (replaces concat + big matmul).
        contrib = jnp.dot(ho.astype(cdt), wout_ref[h],
                          preferred_element_type=jnp.float32)      # (TQ, D) f32
        acc = contrib if acc is None else acc + contrib

    o_ref[0] = (acc + bout_ref[...]).astype(o_ref.dtype)


def multi_head_attention(q, k, v, wq, bq, wout, bout, *, tq=None,
                         compute_dtype=jnp.float32):
    """q,k,v: [B,S,D]; wq: [H,D,d_k]; bq: [H,d_k]; wout: [D,D]; bout: [D]."""
    B, S, D = q.shape
    H, D_in, d_k = wq.shape
    assert D_in == D and H * d_k == D

    cdt = jnp.dtype(compute_dtype)
    approx_recip = cdt != jnp.dtype(jnp.float32)

    if tq is None:
        s_pad, tq = _choose_tiles(S)
    else:
        assert tq % 8 == 0
        s_pad = _round_up(S, tq)
    assert s_pad % tq == 0
    n_q_tiles = s_pad // tq

    # Cast activations to the compute dtype (halves HBM traffic for bf16) and
    # pad the sequence axis up to the tile size (padded keys masked in-kernel).
    qc, kc, vc = (t.astype(cdt) for t in (q, k, v))
    if s_pad != S:
        pad = ((0, 0), (0, s_pad - S), (0, 0))
        qc, kc, vc = (jnp.pad(t, pad) for t in (qc, kc, vc))

    # Stack per-head q_linear weights/bias into one lane-dense operand; keep
    # the output projection head-major so the kernel indexes its leading axis.
    wq_all = jnp.transpose(wq, (1, 0, 2)).reshape(D, H * d_k).astype(cdt)
    bq_all = bq.reshape(1, H * d_k).astype(jnp.float32)
    wout_hm = wout.reshape(H, d_k, D).astype(cdt)
    bout2 = bout.reshape(1, D).astype(jnp.float32)

    kernel = functools.partial(_mha_fused_kernel, n_heads=H, d_k=d_k,
                               s_valid=S, s_total=s_pad, cdt=cdt,
                               approx_recip=approx_recip)

    vmem_limit = _vmem_limit_bytes(s_pad, tq, D, H, d_k, cdt.itemsize)
    cost = pl.CostEstimate(
        flops=int(B * (8 * s_pad * D * D + 4 * s_pad * s_pad * D)),
        transcendentals=int(B * H * s_pad * s_pad),
        bytes_accessed=int(cdt.itemsize * 3 * B * s_pad * D + 4 * B * s_pad * D
                           + cdt.itemsize * 2 * D * D + 8 * D),
    )

    single = pl.Buffered(1)   # blocks whose index never changes mid-batch
    out = pl.pallas_call(
        kernel,
        out_shape=jax.ShapeDtypeStruct((B, s_pad, D), jnp.float32),
        grid=(B, n_q_tiles),
        in_specs=[
            pl.BlockSpec((1, tq, D), lambda b, qi: (b, qi, 0)),          # q tile
            pl.BlockSpec((1, s_pad, D), lambda b, qi: (b, 0, 0),
                         pipeline_mode=single),                          # full k
            pl.BlockSpec((1, s_pad, D), lambda b, qi: (b, 0, 0),
                         pipeline_mode=single),                          # full v
            pl.BlockSpec((D, D), lambda b, qi: (0, 0),
                         pipeline_mode=single),                          # Wq_all
            pl.BlockSpec((1, D), lambda b, qi: (0, 0),
                         pipeline_mode=single),                          # bq_all
            pl.BlockSpec((H, d_k, D), lambda b, qi: (0, 0, 0),
                         pipeline_mode=single),                          # Wout (head-major)
            pl.BlockSpec((1, D), lambda b, qi: (0, 0),
                         pipeline_mode=single),                          # bout
        ],
        out_specs=pl.BlockSpec((1, tq, D), lambda b, qi: (b, qi, 0)),
        scratch_shapes=[
            pltpu.VMEM((H, s_pad, d_k), cdt),   # projected K, head-major
            pltpu.VMEM((H, s_pad, d_k), cdt),   # projected V, head-major
        ],
        compiler_params=pltpu.CompilerParams(
            dimension_semantics=("parallel", "arbitrary"),
            vmem_limit_bytes=vmem_limit),
        cost_estimate=cost,
    )(qc, kc, vc, wq_all, bq_all, wout_hm, bout2)

    return out[:, :S, :] if s_pad != S else out


def _reference(q, k, v, wq, bq, wout, bout):
    """Pure-JAX reference mirroring the PyTorch forward (with its bug)."""
    H, D, d_k = wq.shape
    head_outs = []
    for h in range(H):
        nq = q @ wq[h] + bq[h]
        nk = k @ wq[h] + bq[h]
        nv = v @ wq[h] + bq[h]
        s = (nq @ jnp.swapaxes(nk, -2, -1)) / math.sqrt(d_k)
        w = jax.nn.softmax(s, axis=-1)
        head_outs.append(w @ nv)
    concat = jnp.concatenate(head_outs, axis=-1)
    return concat @ wout + bout


if __name__ == "__main__":
    def _make_inputs(key, B, S, d_model, n_heads):
        d_k = d_model // n_heads
        ks = jax.random.split(key, 7)
        q = jax.random.normal(ks[0], (B, S, d_model), jnp.float32)
        k = jax.random.normal(ks[1], (B, S, d_model), jnp.float32)
        v = jax.random.normal(ks[2], (B, S, d_model), jnp.float32)
        scale = 1.0 / math.sqrt(d_model)
        wq = jax.random.uniform(ks[3], (n_heads, d_model, d_k), jnp.float32,
                                minval=-scale, maxval=scale)
        bq = jax.random.uniform(ks[4], (n_heads, d_k), jnp.float32,
                                minval=-scale, maxval=scale)
        wout = jax.random.uniform(ks[5], (d_model, d_model), jnp.float32,
                                  minval=-scale, maxval=scale)
        bout = jax.random.uniform(ks[6], (d_model,), jnp.float32,
                                  minval=-scale, maxval=scale)
        return q, k, v, wq, bq, wout, bout

    key = jax.random.PRNGKey(0)
    key1, key2 = jax.random.split(key)

    # Case 1: small config, exact f32 path, strict tolerance.
    args1 = _make_inputs(key1, 2, 8, 32, 4)
    out1 = multi_head_attention(*args1)
    jax.block_until_ready(out1)
    ref1 = _reference(*args1)
    assert out1.shape == ref1.shape
    assert jnp.allclose(out1, ref1, atol=1e-4, rtol=1e-4), "f32 mismatch vs reference"

    # Case 2: module-native head width (d_model=512, 8 heads), sequence length
    # that is not a multiple of 8 (exercises the pad + key-mask path) and the
    # bf16 MXU compute path with approx reciprocal.
    args2 = _make_inputs(key2, 2, 20, 512, 8)
    out2 = multi_head_attention(*args2, compute_dtype=jnp.bfloat16)
    jax.block_until_ready(out2)
    ref2 = _reference(*args2)
    assert out2.shape == ref2.shape
    max_err = jnp.max(jnp.abs(out2 - ref2))
    assert jnp.allclose(out2, ref2, atol=0.08, rtol=0.08), \
        f"bf16 mismatch vs reference (max abs err {max_err})"

    print("KERNEL_OK")
</pallas_src>

<mosaic_0001>
module attributes {stable_mosaic.version = 11 : i64} {
  func.func @_mha_fused_kernel(%arg0: i32, %arg1: i32, %arg2: memref<1x8x32xf32, #tpu.memory_space<vmem>>, %arg3: memref<1x8x32xf32, #tpu.memory_space<vmem>>, %arg4: memref<1x8x32xf32, #tpu.memory_space<vmem>>, %arg5: memref<32x32xf32, #tpu.memory_space<vmem>>, %arg6: memref<1x32xf32, #tpu.memory_space<vmem>>, %arg7: memref<4x8x32xf32, #tpu.memory_space<vmem>>, %arg8: memref<1x32xf32, #tpu.memory_space<vmem>>, %arg9: memref<1x8x32xf32, #tpu.memory_space<vmem>>, %arg10: memref<4x8x8xf32, #tpu.memory_space<vmem>>, %arg11: memref<4x8x8xf32, #tpu.memory_space<vmem>>) attributes {dimension_semantics = [#tpu.dimension_semantics<parallel>, #tpu.dimension_semantics<arbitrary>], iteration_bounds = array<i64: 2, 1>, scalar_prefetch = 0 : i64, scratch_operands = 2 : i64, tpu.core_type = #tpu.core_type<tc>, window_params = [{transform_indices = @transform_0, window_bounds = array<i64: 1, 8, 32>}, {pipeline_mode = #tpu.pipeline_mode<synchronous>, transform_indices = @transform_1, window_bounds = array<i64: 1, 8, 32>}, {pipeline_mode = #tpu.pipeline_mode<synchronous>, transform_indices = @transform_2, window_bounds = array<i64: 1, 8, 32>}, {pipeline_mode = #tpu.pipeline_mode<synchronous>, transform_indices = @transform_3, window_bounds = array<i64: 32, 32>}, {pipeline_mode = #tpu.pipeline_mode<synchronous>, transform_indices = @transform_4, window_bounds = array<i64: 1, 32>}, {pipeline_mode = #tpu.pipeline_mode<synchronous>, transform_indices = @transform_5, window_bounds = array<i64: 4, 8, 32>}, {pipeline_mode = #tpu.pipeline_mode<synchronous>, transform_indices = @transform_6, window_bounds = array<i64: 1, 32>}, {transform_indices = @transform_7, window_bounds = array<i64: 1, 8, 32>}]} {
    %c0 = arith.constant 0 : index
    %c0_0 = arith.constant 0 : index
    %0 = vector.load %arg5[%c0, %c0_0] : memref<32x32xf32, #tpu.memory_space<vmem>>, vector<32x32xf32>
    %c0_1 = arith.constant 0 : index
    %c0_2 = arith.constant 0 : index
    %1 = vector.load %arg6[%c0_1, %c0_2] : memref<1x32xf32, #tpu.memory_space<vmem>>, vector<1x32xf32>
    %c0_i32 = arith.constant 0 : i32
    %2 = arith.cmpi eq, %arg1, %c0_i32 : i32
    %3 = arith.extui %2 : i1 to i32
    %c0_i32_3 = arith.constant 0 : i32
    %4 = arith.cmpi ne, %3, %c0_i32_3 : i32
    scf.if %4 {
      %c0_66 = arith.constant 0 : index
      %c0_67 = arith.constant 0 : index
      %c0_68 = arith.constant 0 : index
      %101 = vector.load %arg3[%c0_66, %c0_67, %c0_68] : memref<1x8x32xf32, #tpu.memory_space<vmem>>, vector<1x8x32xf32>
      %102 = vector.shape_cast %101 : vector<1x8x32xf32> to vector<8x32xf32>
      %cst_69 = arith.constant dense<0.000000e+00> : vector<8x32xf32>
      %103 = tpu.matmul %102, %0, %cst_69 {dimension_numbers = #tpu.dot_dimension_numbers<[1], [0], [0], [1], [0, 0, 1, 1], [], []>} : vector<8x32xf32>, vector<32x32xf32>, vector<8x32xf32> -> vector<8x32xf32>
      %104 = vector.broadcast %1 : vector<1x32xf32> to vector<8x32xf32>
      %105 = arith.addf %103, %104 : vector<8x32xf32>
      %c0_70 = arith.constant 0 : index
      %c0_71 = arith.constant 0 : index
      %c0_72 = arith.constant 0 : index
      %106 = vector.load %arg4[%c0_70, %c0_71, %c0_72] : memref<1x8x32xf32, #tpu.memory_space<vmem>>, vector<1x8x32xf32>
      %107 = vector.shape_cast %106 : vector<1x8x32xf32> to vector<8x32xf32>
      %cst_73 = arith.constant dense<0.000000e+00> : vector<8x32xf32>
      %108 = tpu.matmul %107, %0, %cst_73 {dimension_numbers = #tpu.dot_dimension_numbers<[1], [0], [0], [1], [0, 0, 1, 1], [], []>} : vector<8x32xf32>, vector<32x32xf32>, vector<8x32xf32> -> vector<8x32xf32>
      %109 = vector.broadcast %1 : vector<1x32xf32> to vector<8x32xf32>
      %110 = arith.addf %108, %109 : vector<8x32xf32>
      %111 = vector.extract_strided_slice %105 {offsets = [0, 0], sizes = [8, 8], strides = [1, 1]} : vector<8x32xf32> to vector<8x8xf32>
      %c0_74 = arith.constant 0 : index
      %c0_75 = arith.constant 0 : index
      %c0_76 = arith.constant 0 : index
      %112 = vector.load %arg10[%c0_74, %c0_75, %c0_76] : memref<4x8x8xf32, #tpu.memory_space<vmem>>, vector<1x8x8xf32>
      %113 = vector.shape_cast %112 : vector<1x8x8xf32> to vector<8x8xf32>
      %114 = vector.shape_cast %111 : vector<8x8xf32> to vector<1x8x8xf32>
      tpu.vector_store %arg10[%c0_74, %c0_75, %c0_76], %114 {strides = array<i32>} : memref<4x8x8xf32, #tpu.memory_space<vmem>>, vector<1x8x8xf32>,
      %115 = vector.extract_strided_slice %110 {offsets = [0, 0], sizes = [8, 8], strides = [1, 1]} : vector<8x32xf32> to vector<8x8xf32>
      %c0_77 = arith.constant 0 : index
      %c0_78 = arith.constant 0 : index
      %c0_79 = arith.constant 0 : index
      %116 = vector.load %arg11[%c0_77, %c0_78, %c0_79] : memref<4x8x8xf32, #tpu.memory_space<vmem>>, vector<1x8x8xf32>
      %117 = vector.shape_cast %116 : vector<1x8x8xf32> to vector<8x8xf32>
      %118 = vector.shape_cast %115 : vector<8x8xf32> to vector<1x8x8xf32>
      tpu.vector_store %arg11[%c0_77, %c0_78, %c0_79], %118 {strides = array<i32>} : memref<4x8x8xf32, #tpu.memory_space<vmem>>, vector<1x8x8xf32>,
      %119 = vector.extract_strided_slice %105 {offsets = [0, 8], sizes = [8, 8], strides = [1, 1]} : vector<8x32xf32> to vector<8x8xf32>
      %c1_80 = arith.constant 1 : index
      %c0_81 = arith.constant 0 : index
      %c0_82 = arith.constant 0 : index
      %120 = vector.load %arg10[%c1_80, %c0_81, %c0_82] : memref<4x8x8xf32, #tpu.memory_space<vmem>>, vector<1x8x8xf32>
      %121 = vector.shape_cast %120 : vector<1x8x8xf32> to vector<8x8xf32>
      %122 = vector.shape_cast %119 : vector<8x8xf32> to vector<1x8x8xf32>
      tpu.vector_store %arg10[%c1_80, %c0_81, %c0_82], %122 {strides = array<i32>} : memref<4x8x8xf32, #tpu.memory_space<vmem>>, vector<1x8x8xf32>,
      %123 = vector.extract_strided_slice %110 {offsets = [0, 8], sizes = [8, 8], strides = [1, 1]} : vector<8x32xf32> to vector<8x8xf32>
      %c1_83 = arith.constant 1 : index
      %c0_84 = arith.constant 0 : index
      %c0_85 = arith.constant 0 : index
      %124 = vector.load %arg11[%c1_83, %c0_84, %c0_85] : memref<4x8x8xf32, #tpu.memory_space<vmem>>, vector<1x8x8xf32>
      %125 = vector.shape_cast %124 : vector<1x8x8xf32> to vector<8x8xf32>
      %126 = vector.shape_cast %123 : vector<8x8xf32> to vector<1x8x8xf32>
      tpu.vector_store %arg11[%c1_83, %c0_84, %c0_85], %126 {strides = array<i32>} : memref<4x8x8xf32, #tpu.memory_space<vmem>>, vector<1x8x8xf32>,
      %127 = vector.extract_strided_slice %105 {offsets = [0, 16], sizes = [8, 8], strides = [1, 1]} : vector<8x32xf32> to vector<8x8xf32>
      %c2_86 = arith.constant 2 : index
      %c0_87 = arith.constant 0 : index
      %c0_88 = arith.constant 0 : index
      %128 = vector.load %arg10[%c2_86, %c0_87, %c0_88] : memref<4x8x8xf32, #tpu.memory_space<vmem>>, vector<1x8x8xf32>
      %129 = vector.shape_cast %128 : vector<1x8x8xf32> to vector<8x8xf32>
      %130 = vector.shape_cast %127 : vector<8x8xf32> to vector<1x8x8xf32>
      tpu.vector_store %arg10[%c2_86, %c0_87, %c0_88], %130 {strides = array<i32>} : memref<4x8x8xf32, #tpu.memory_space<vmem>>, vector<1x8x8xf32>,
      %131 = vector.extract_strided_slice %110 {offsets = [0, 16], sizes = [8, 8], strides = [1, 1]} : vector<8x32xf32> to vector<8x8xf32>
      %c2_89 = arith.constant 2 : index
      %c0_90 = arith.constant 0 : index
      %c0_91 = arith.constant 0 : index
      %132 = vector.load %arg11[%c2_89, %c0_90, %c0_91] : memref<4x8x8xf32, #tpu.memory_space<vmem>>, vector<1x8x8xf32>
      %133 = vector.shape_cast %132 : vector<1x8x8xf32> to vector<8x8xf32>
      %134 = vector.shape_cast %131 : vector<8x8xf32> to vector<1x8x8xf32>
      tpu.vector_store %arg11[%c2_89, %c0_90, %c0_91], %134 {strides = array<i32>} : memref<4x8x8xf32, #tpu.memory_space<vmem>>, vector<1x8x8xf32>,
      %135 = vector.extract_strided_slice %105 {offsets = [0, 24], sizes = [8, 8], strides = [1, 1]} : vector<8x32xf32> to vector<8x8xf32>
      %c3_92 = arith.constant 3 : index
      %c0_93 = arith.constant 0 : index
      %c0_94 = arith.constant 0 : index
      %136 = vector.load %arg10[%c3_92, %c0_93, %c0_94] : memref<4x8x8xf32, #tpu.memory_space<vmem>>, vector<1x8x8xf32>
      %137 = vector.shape_cast %136 : vector<1x8x8xf32> to vector<8x8xf32>
      %138 = vector.shape_cast %135 : vector<8x8xf32> to vector<1x8x8xf32>
      tpu.vector_store %arg10[%c3_92, %c0_93, %c0_94], %138 {strides = array<i32>} : memref<4x8x8xf32, #tpu.memory_space<vmem>>, vector<1x8x8xf32>,
      %139 = vector.extract_strided_slice %110 {offsets = [0, 24], sizes = [8, 8], strides = [1, 1]} : vector<8x32xf32> to vector<8x8xf32>
      %c3_95 = arith.constant 3 : index
      %c0_96 = arith.constant 0 : index
      %c0_97 = arith.constant 0 : index
      %140 = vector.load %arg11[%c3_95, %c0_96, %c0_97] : memref<4x8x8xf32, #tpu.memory_space<vmem>>, vector<1x8x8xf32>
      %141 = vector.shape_cast %140 : vector<1x8x8xf32> to vector<8x8xf32>
      %142 = vector.shape_cast %139 : vector<8x8xf32> to vector<1x8x8xf32>
      tpu.vector_store %arg11[%c3_95, %c0_96, %c0_97], %142 {strides = array<i32>} : memref<4x8x8xf32, #tpu.memory_space<vmem>>, vector<1x8x8xf32>,
    } else {
    }
    %c0_4 = arith.constant 0 : index
    %c0_5 = arith.constant 0 : index
    %c0_6 = arith.constant 0 : index
    %5 = vector.load %arg2[%c0_4, %c0_5, %c0_6] : memref<1x8x32xf32, #tpu.memory_space<vmem>>, vector<1x8x32xf32>
    %6 = vector.shape_cast %5 : vector<1x8x32xf32> to vector<8x32xf32>
    %cst = arith.constant dense<0.000000e+00> : vector<8x32xf32>
    %7 = tpu.matmul %6, %0, %cst {dimension_numbers = #tpu.dot_dimension_numbers<[1], [0], [0], [1], [0, 0, 1, 1], [], []>} : vector<8x32xf32>, vector<32x32xf32>, vector<8x32xf32> -> vector<8x32xf32>
    %8 = vector.broadcast %1 : vector<1x32xf32> to vector<8x32xf32>
    %9 = arith.addf %7, %8 : vector<8x32xf32>
    %cst_7 = arith.constant 0.353553385 : f32
    %10 = vector.broadcast %cst_7 : f32 to vector<8x32xf32>
    %11 = arith.mulf %9, %10 : vector<8x32xf32>
    %12 = vector.extract_strided_slice %11 {offsets = [0, 0], sizes = [8, 8], strides = [1, 1]} : vector<8x32xf32> to vector<8x8xf32>
    %c0_8 = arith.constant 0 : index
    %c0_9 = arith.constant 0 : index
    %c0_10 = arith.constant 0 : index
    %13 = vector.load %arg10[%c0_8, %c0_9, %c0_10] : memref<4x8x8xf32, #tpu.memory_space<vmem>>, vector<1x8x8xf32>
    %14 = vector.shape_cast %13 : vector<1x8x8xf32> to vector<8x8xf32>
    %c0_11 = arith.constant 0 : index
    %c0_12 = arith.constant 0 : index
    %c0_13 = arith.constant 0 : index
    %15 = vector.load %arg11[%c0_11, %c0_12, %c0_13] : memref<4x8x8xf32, #tpu.memory_space<vmem>>, vector<1x8x8xf32>
    %16 = vector.shape_cast %15 : vector<1x8x8xf32> to vector<8x8xf32>
    %cst_14 = arith.constant dense<0.000000e+00> : vector<8x8xf32>
    %17 = tpu.matmul %12, %14, %cst_14 {dimension_numbers = #tpu.dot_dimension_numbers<[1], [1], [0], [0], [0, 0, 1, 0], [], []>} : vector<8x8xf32>, vector<8x8xf32>, vector<8x8xf32> -> vector<8x8xf32>
    %cst_15 = arith.constant dense<0xFF800000> : vector<8xf32>
    %18 = vector.multi_reduction <maximumf>, %17, %cst_15 [1] : vector<8x8xf32> to vector<8xf32>
    %19 = vector.shape_cast %18 : vector<8xf32> to vector<8x1xf32>
    %20 = vector.broadcast %19 : vector<8x1xf32> to vector<8x8xf32>
    %21 = arith.subf %17, %20 : vector<8x8xf32>
    %22 = math.exp %21 : vector<8x8xf32>
    %cst_16 = arith.constant dense<0.000000e+00> : vector<8xf32>
    %23 = vector.multi_reduction <add>, %22, %cst_16 [1] : vector<8x8xf32> to vector<8xf32>
    %24 = vector.shape_cast %23 : vector<8xf32> to vector<8x1xf32>
    %cst_17 = arith.constant dense<0.000000e+00> : vector<8x8xf32>
    %25 = tpu.matmul %22, %16, %cst_17 {dimension_numbers = #tpu.dot_dimension_numbers<[1], [0], [0], [1], [0, 0, 1, 1], [], []>} : vector<8x8xf32>, vector<8x8xf32>, vector<8x8xf32> -> vector<8x8xf32>
    %26 = tpu.reciprocal %24 : vector<8x1xf32> -> vector<8x1xf32>
    %27 = vector.broadcast %26 : vector<8x1xf32> to vector<8x8xf32>
    %28 = arith.mulf %25, %27 : vector<8x8xf32>
    %c0_18 = arith.constant 0 : index
    %c0_19 = arith.constant 0 : index
    %c0_20 = arith.constant 0 : index
    %29 = vector.load %arg7[%c0_18, %c0_19, %c0_20] : memref<4x8x32xf32, #tpu.memory_space<vmem>>, vector<1x8x32xf32>
    %30 = vector.shape_cast %29 : vector<1x8x32xf32> to vector<8x32xf32>
    %cst_21 = arith.constant dense<0.000000e+00> : vector<8x32xf32>
    %31 = tpu.matmul %28, %30, %cst_21 {dimension_numbers = #tpu.dot_dimension_numbers<[1], [0], [0], [1], [0, 0, 1, 1], [], []>} : vector<8x8xf32>, vector<8x32xf32>, vector<8x32xf32> -> vector<8x32xf32>
    %32 = vector.extract_strided_slice %11 {offsets = [0, 8], sizes = [8, 8], strides = [1, 1]} : vector<8x32xf32> to vector<8x8xf32>
    %c1 = arith.constant 1 : index
    %c0_22 = arith.constant 0 : index
    %c0_23 = arith.constant 0 : index
    %33 = vector.load %arg10[%c1, %c0_22, %c0_23] : memref<4x8x8xf32, #tpu.memory_space<vmem>>, vector<1x8x8xf32>
    %34 = vector.shape_cast %33 : vector<1x8x8xf32> to vector<8x8xf32>
    %c1_24 = arith.constant 1 : index
    %c0_25 = arith.constant 0 : index
    %c0_26 = arith.constant 0 : index
    %35 = vector.load %arg11[%c1_24, %c0_25, %c0_26] : memref<4x8x8xf32, #tpu.memory_space<vmem>>, vector<1x8x8xf32>
    %36 = vector.shape_cast %35 : vector<1x8x8xf32> to vector<8x8xf32>
    %cst_27 = arith.constant dense<0.000000e+00> : vector<8x8xf32>
    %37 = tpu.matmul %32, %34, %cst_27 {dimension_numbers = #tpu.dot_dimension_numbers<[1], [1], [0], [0], [0, 0, 1, 0], [], []>} : vector<8x8xf32>, vector<8x8xf32>, vector<8x8xf32> -> vector<8x8xf32>
    %cst_28 = arith.constant dense<0xFF800000> : vector<8xf32>
    %38 = vector.multi_reduction <maximumf>, %37, %cst_28 [1] : vector<8x8xf32> to vector<8xf32>
    %39 = vector.shape_cast %38 : vector<8xf32> to vector<8x1xf32>
    %40 = vector.broadcast %39 : vector<8x1xf32> to vector<8x8xf32>
    %41 = arith.subf %37, %40 : vector<8x8xf32>
    %42 = math.exp %41 : vector<8x8xf32>
    %cst_29 = arith.constant dense<0.000000e+00> : vector<8xf32>
    %43 = vector.multi_reduction <add>, %42, %cst_29 [1] : vector<8x8xf32> to vector<8xf32>
    %44 = vector.shape_cast %43 : vector<8xf32> to vector<8x1xf32>
    %cst_30 = arith.constant dense<0.000000e+00> : vector<8x8xf32>
    %45 = tpu.matmul %42, %36, %cst_30 {dimension_numbers = #tpu.dot_dimension_numbers<[1], [0], [0], [1], [0, 0, 1, 1], [], []>} : vector<8x8xf32>, vector<8x8xf32>, vector<8x8xf32> -> vector<8x8xf32>
    %46 = tpu.reciprocal %44 : vector<8x1xf32> -> vector<8x1xf32>
    %47 = vector.broadcast %46 : vector<8x1xf32> to vector<8x8xf32>
    %48 = arith.mulf %45, %47 : vector<8x8xf32>
    %c1_31 = arith.constant 1 : index
    %c0_32 = arith.constant 0 : index
    %c0_33 = arith.constant 0 : index
    %49 = vector.load %arg7[%c1_31, %c0_32, %c0_33] : memref<4x8x32xf32, #tpu.memory_space<vmem>>, vector<1x8x32xf32>
    %50 = vector.shape_cast %49 : vector<1x8x32xf32> to vector<8x32xf32>
    %cst_34 = arith.constant dense<0.000000e+00> : vector<8x32xf32>
    %51 = tpu.matmul %48, %50, %cst_34 {dimension_numbers = #tpu.dot_dimension_numbers<[1], [0], [0], [1], [0, 0, 1, 1], [], []>} : vector<8x8xf32>, vector<8x32xf32>, vector<8x32xf32> -> vector<8x32xf32>
    %52 = arith.addf %31, %51 : vector<8x32xf32>
    %53 = vector.extract_strided_slice %11 {offsets = [0, 16], sizes = [8, 8], strides = [1, 1]} : vector<8x32xf32> to vector<8x8xf32>
    %c2 = arith.constant 2 : index
    %c0_35 = arith.constant 0 : index
    %c0_36 = arith.constant 0 : index
    %54 = vector.load %arg10[%c2, %c0_35, %c0_36] : memref<4x8x8xf32, #tpu.memory_space<vmem>>, vector<1x8x8xf32>
    %55 = vector.shape_cast %54 : vector<1x8x8xf32> to vector<8x8xf32>
    %c2_37 = arith.constant 2 : index
    %c0_38 = arith.constant 0 : index
    %c0_39 = arith.constant 0 : index
    %56 = vector.load %arg11[%c2_37, %c0_38, %c0_39] : memref<4x8x8xf32, #tpu.memory_space<vmem>>, vector<1x8x8xf32>
    %57 = vector.shape_cast %56 : vector<1x8x8xf32> to vector<8x8xf32>
    %cst_40 = arith.constant dense<0.000000e+00> : vector<8x8xf32>
    %58 = tpu.matmul %53, %55, %cst_40 {dimension_numbers = #tpu.dot_dimension_numbers<[1], [1], [0], [0], [0, 0, 1, 0], [], []>} : vector<8x8xf32>, vector<8x8xf32>, vector<8x8xf32> -> vector<8x8xf32>
    %cst_41 = arith.constant dense<0xFF800000> : vector<8xf32>
    %59 = vector.multi_reduction <maximumf>, %58, %cst_41 [1] : vector<8x8xf32> to vector<8xf32>
    %60 = vector.shape_cast %59 : vector<8xf32> to vector<8x1xf32>
    %61 = vector.broadcast %60 : vector<8x1xf32> to vector<8x8xf32>
    %62 = arith.subf %58, %61 : vector<8x8xf32>
    %63 = math.exp %62 : vector<8x8xf32>
    %cst_42 = arith.constant dense<0.000000e+00> : vector<8xf32>
    %64 = vector.multi_reduction <add>, %63, %cst_42 [1] : vector<8x8xf32> to vector<8xf32>
    %65 = vector.shape_cast %64 : vector<8xf32> to vector<8x1xf32>
    %cst_43 = arith.constant dense<0.000000e+00> : vector<8x8xf32>
    %66 = tpu.matmul %63, %57, %cst_43 {dimension_numbers = #tpu.dot_dimension_numbers<[1], [0], [0], [1], [0, 0, 1, 1], [], []>} : vector<8x8xf32>, vector<8x8xf32>, vector<8x8xf32> -> vector<8x8xf32>
    %67 = tpu.reciprocal %65 : vector<8x1xf32> -> vector<8x1xf32>
    %68 = vector.broadcast %67 : vector<8x1xf32> to vector<8x8xf32>
    %69 = arith.mulf %66, %68 : vector<8x8xf32>
    %c2_44 = arith.constant 2 : index
    %c0_45 = arith.constant 0 : index
    %c0_46 = arith.constant 0 : index
    %70 = vector.load %arg7[%c2_44, %c0_45, %c0_46] : memref<4x8x32xf32, #tpu.memory_space<vmem>>, vector<1x8x32xf32>
    %71 = vector.shape_cast %70 : vector<1x8x32xf32> to vector<8x32xf32>
    %cst_47 = arith.constant dense<0.000000e+00> : vector<8x32xf32>
    %72 = tpu.matmul %69, %71, %cst_47 {dimension_numbers = #tpu.dot_dimension_numbers<[1], [0], [0], [1], [0, 0, 1, 1], [], []>} : vector<8x8xf32>, vector<8x32xf32>, vector<8x32xf32> -> vector<8x32xf32>
    %73 = arith.addf %52, %72 : vector<8x32xf32>
    %74 = vector.extract_strided_slice %11 {offsets = [0, 24], sizes = [8, 8], strides = [1, 1]} : vector<8x32xf32> to vector<8x8xf32>
    %c3 = arith.constant 3 : index
    %c0_48 = arith.constant 0 : index
    %c0_49 = arith.constant 0 : index
    %75 = vector.load %arg10[%c3, %c0_48, %c0_49] : memref<4x8x8xf32, #tpu.memory_space<vmem>>, vector<1x8x8xf32>
    %76 = vector.shape_cast %75 : vector<1x8x8xf32> to vector<8x8xf32>
    %c3_50 = arith.constant 3 : index
    %c0_51 = arith.constant 0 : index
    %c0_52 = arith.constant 0 : index
    %77 = vector.load %arg11[%c3_50, %c0_51, %c0_52] : memref<4x8x8xf32, #tpu.memory_space<vmem>>, vector<1x8x8xf32>
    %78 = vector.shape_cast %77 : vector<1x8x8xf32> to vector<8x8xf32>
    %cst_53 = arith.constant dense<0.000000e+00> : vector<8x8xf32>
    %79 = tpu.matmul %74, %76, %cst_53 {dimension_numbers = #tpu.dot_dimension_numbers<[1], [1], [0], [0], [0, 0, 1, 0], [], []>} : vector<8x8xf32>, vector<8x8xf32>, vector<8x8xf32> -> vector<8x8xf32>
    %cst_54 = arith.constant dense<0xFF800000> : vector<8xf32>
    %80 = vector.multi_reduction <maximumf>, %79, %cst_54 [1] : vector<8x8xf32> to vector<8xf32>
    %81 = vector.shape_cast %80 : vector<8xf32> to vector<8x1xf32>
    %82 = vector.broadcast %81 : vector<8x1xf32> to vector<8x8xf32>
    %83 = arith.subf %79, %82 : vector<8x8xf32>
    %84 = math.exp %83 : vector<8x8xf32>
    %cst_55 = arith.constant dense<0.000000e+00> : vector<8xf32>
    %85 = vector.multi_reduction <add>, %84, %cst_55 [1] : vector<8x8xf32> to vector<8xf32>
    %86 = vector.shape_cast %85 : vector<8xf32> to vector<8x1xf32>
    %cst_56 = arith.constant dense<0.000000e+00> : vector<8x8xf32>
    %87 = tpu.matmul %84, %78, %cst_56 {dimension_numbers = #tpu.dot_dimension_numbers<[1], [0], [0], [1], [0, 0, 1, 1], [], []>} : vector<8x8xf32>, vector<8x8xf32>, vector<8x8xf32> -> vector<8x8xf32>
    %88 = tpu.reciprocal %86 : vector<8x1xf32> -> vector<8x1xf32>
    %89 = vector.broadcast %88 : vector<8x1xf32> to vector<8x8xf32>
    %90 = arith.mulf %87, %89 : vector<8x8xf32>
    %c3_57 = arith.constant 3 : index
    %c0_58 = arith.constant 0 : index
    %c0_59 = arith.constant 0 : index
    %91 = vector.load %arg7[%c3_57, %c0_58, %c0_59] : memref<4x8x32xf32, #tpu.memory_space<vmem>>, vector<1x8x32xf32>
    %92 = vector.shape_cast %91 : vector<1x8x32xf32> to vector<8x32xf32>
    %cst_60 = arith.constant dense<0.000000e+00> : vector<8x32xf32>
    %93 = tpu.matmul %90, %92, %cst_60 {dimension_numbers = #tpu.dot_dimension_numbers<[1], [0], [0], [1], [0, 0, 1, 1], [], []>} : vector<8x8xf32>, vector<8x32xf32>, vector<8x32xf32> -> vector<8x32xf32>
    %94 = arith.addf %73, %93 : vector<8x32xf32>
    %c0_61 = arith.constant 0 : index
    %c0_62 = arith.constant 0 : index
    %95 = vector.load %arg8[%c0_61, %c0_62] : memref<1x32xf32, #tpu.memory_space<vmem>>, vector<1x32xf32>
    %96 = vector.broadcast %95 : vector<1x32xf32> to vector<8x32xf32>
    %97 = arith.addf %94, %96 : vector<8x32xf32>
    %c0_63 = arith.constant 0 : index
    %c0_64 = arith.constant 0 : index
    %c0_65 = arith.constant 0 : index
    %98 = vector.load %arg9[%c0_63, %c0_64, %c0_65] : memref<1x8x32xf32, #tpu.memory_space<vmem>>, vector<1x8x32xf32>
    %99 = vector.shape_cast %98 : vector<1x8x32xf32> to vector<8x32xf32>
    %100 = vector.shape_cast %97 : vector<8x32xf32> to vector<1x8x32xf32>
    tpu.vector_store %arg9[%c0_63, %c0_64, %c0_65], %100 {strides = array<i32>} : memref<1x8x32xf32, #tpu.memory_space<vmem>>, vector<1x8x32xf32>,
    return
  }
  func.func @transform_0(%arg0: i32, %arg1: i32) -> (i32, i32, i32) {
    %c0_i32 = arith.constant 0 : i32
    %c0_i32_0 = arith.constant 0 : i32
    return %arg0, %arg1, %c0_i32 : i32, i32, i32
  }
  func.func @transform_1(%arg0: i32, %arg1: i32) -> (i32, i32, i32) {
    %c0_i32 = arith.constant 0 : i32
    %c0_i32_0 = arith.constant 0 : i32
    %c0_i32_1 = arith.constant 0 : i32
    return %arg0, %c0_i32, %c0_i32_0 : i32, i32, i32
  }
  func.func @transform_2(%arg0: i32, %arg1: i32) -> (i32, i32, i32) {
    %c0_i32 = arith.constant 0 : i32
    %c0_i32_0 = arith.constant 0 : i32
    %c0_i32_1 = arith.constant 0 : i32
    return %arg0, %c0_i32, %c0_i32_0 : i32, i32, i32
  }
  func.func @transform_3(%arg0: i32, %arg1: i32) -> (i32, i32) {
    %c0_i32 = arith.constant 0 : i32
    %c0_i32_0 = arith.constant 0 : i32
    %c0_i32_1 = arith.constant 0 : i32
    return %c0_i32, %c0_i32_0 : i32, i32
  }
  func.func @transform_4(%arg0: i32, %arg1: i32) -> (i32, i32) {
    %c0_i32 = arith.constant 0 : i32
    %c0_i32_0 = arith.constant 0 : i32
    %c0_i32_1 = arith.constant 0 : i32
    return %c0_i32, %c0_i32_0 : i32, i32
  }
  func.func @transform_5(%arg0: i32, %arg1: i32) -> (i32, i32, i32) {
    %c0_i32 = arith.constant 0 : i32
    %c0_i32_0 = arith.constant 0 : i32
    %c0_i32_1 = arith.constant 0 : i32
    %c0_i32_2 = arith.constant 0 : i32
    return %c0_i32, %c0_i32_0, %c0_i32_1 : i32, i32, i32
  }
  func.func @transform_6(%arg0: i32, %arg1: i32) -> (i32, i32) {
    %c0_i32 = arith.constant 0 : i32
    %c0_i32_0 = arith.constant 0 : i32
    %c0_i32_1 = arith.constant 0 : i32
    return %c0_i32, %c0_i32_0 : i32, i32
  }
  func.func @transform_7(%arg0: i32, %arg1: i32) -> (i32, i32, i32) {
    %c0_i32 = arith.constant 0 : i32
    %c0_i32_0 = arith.constant 0 : i32
    return %arg0, %arg1, %c0_i32 : i32, i32, i32
  }
}

</mosaic_0001>

<llo_original>
// kernel: tpu_custom_call.1
$region0: #{tpu_custom_call.1}
  #allocation0 [shape = 'u32[]', space=smem, size = 0x4, offset = 0x4, fixed_abs, tag = 'smem constant byte address 0x4 - core index']
  #allocation1 [shape = 'u32[144,128]{1,0:T(1,128)}', space=vmem, size = 0x12000, scoped, tag = 'internal scratch']
  #allocation2 [shape = 'f32[4,8,8]{2,1,0:T(8,128)}', space=vmem, size = 0x4000, scoped, tag = 'scratch operand']
  #allocation3 [shape = 'f32[4,8,8]{2,1,0:T(8,128)}', space=vmem, size = 0x4000, scoped, tag = 'scratch operand']
  %s0 = inlined_call_operand.hbm [shape: f32[2,8,32], index: 0, kind: input, shape index: {}]
  %s1 = inlined_call_operand.hbm [shape: f32[2,8,32], index: 1, kind: input, shape index: {}]
  %s2 = inlined_call_operand.hbm [shape: f32[2,8,32], index: 2, kind: input, shape index: {}]
  %s3 = inlined_call_operand.hbm [shape: f32[32,32], index: 3, kind: input, shape index: {}]
  %s4 = inlined_call_operand.vmem [shape: f32[1,32], index: 4, kind: input, shape index: {}]
  %s5 = inlined_call_operand.hbm [shape: f32[4,8,32], index: 5, kind: input, shape index: {}]
  %s6 = inlined_call_operand.vmem [shape: f32[1,32], index: 6, kind: input, shape index: {}]
  %s7 = inlined_call_operand.hbm [shape: f32[2,8,32], index: 7, kind: output, shape index: {}]
  %s8 = sld [smem:[#allocation0]]
  $region85: #{tpu_custom_call.1} parent=0
    _
  %s10 = ssub.s32 1, %s8
  %s11 = scalar_select 0, %s10, %s8
  $region1: #{tpu_custom_call.1} parent=0
    #allocation4 [shape = 'u8[8192]{0}', space=vmem, size = 0x2000, scoped, tag = 'input window, operand 0']
    #allocation5 [shape = 's32[2]{0}', space=sflag, size = 0x8, scoped, tag = 'scoped memory for tpu_custom_call.1']
    #allocation6 [shape = 's32[2]{0}', space=sflag, size = 0x8, scoped, tag = 'scoped memory for tpu_custom_call.1']
    #allocation7 [shape = 'u8[4096]{0}', space=vmem, size = 0x1000, scoped, tag = 'input window, operand 1, single buffered']
    #allocation8 [shape = 's32[1]{0}', space=sflag, size = 0x4, scoped, tag = 'scoped memory for tpu_custom_call.1']
    #allocation9 [shape = 'u8[4096]{0}', space=vmem, size = 0x1000, scoped, tag = 'input window, operand 2, single buffered']
    #allocation10 [shape = 'u8[16384]{0}', space=vmem, size = 0x4000, scoped, tag = 'input window, operand 3, single buffered']
    #allocation11 [shape = 's32[1]{0}', space=sflag, size = 0x4, scoped, tag = 'scoped memory for tpu_custom_call.1']
    #allocation12 [shape = 'u8[16384]{0}', space=vmem, size = 0x4000, scoped, tag = 'input window, operand 5, single buffered']
    #allocation13 [shape = 'u8[8192]{0}', space=vmem, size = 0x2000, scoped, tag = 'output window, operand 0']
    %12 = vsyncpa [#allocation5], 0
    %s13 = scalar_lea.sflag [#allocation5], 1
    %14 = vsyncpa %s13, 0
    %15 = vsyncpa [#allocation8], 0
    %16 = vsyncpa [#allocation11], 0
    %17 = vsyncpa [#allocation6], 0
    %s18 = scalar_lea.sflag [#allocation6], 1
    %19 = vsyncpa %s18, 0
    loop: start=0, step=1, limit=4
    $region2: #{tpu_custom_call.1} parent=1 // loop_pre_header
      _
    $region3: #{tpu_custom_call.1} parent=1 // loop_header
      %s21 = sphi 0, %s25
      %p22 = scmp.ge.s32.totalorder %s21, 4
      %s28 = sphi 0, %s40
      %s29 = sphi 0, %s36
      %s30 = sphi 0, %s28
      %s31 = sphi 0, %s29
      %s32 = sphi 0, %s30
      %s33 = sphi 0, %s31
      %s45 = sphi 0, %s47
      %s48 = sphi 0, %s45
      %s49 = sphi 0, %s48
      %s65 = sphi 0, %s49
      %s71 = sphi 0, %s73
      %s74 = sphi 0, %s71
      %s75 = sphi 0, %s74
      %s91 = sphi 0, %s75
      %s97 = sphi 0, %s99
      %s100 = sphi 0, %s97
      %s101 = sphi 0, %s100
      %s117 = sphi 0, %s101
      %s121 = sphi 0, %s121
      %s123 = sphi 0, %s121
      %s124 = sphi 0, %s123
      %s138 = sphi 0, %s124
      %s142 = sphi 0, %s142
      %s144 = sphi 0, %s142
      %s145 = sphi 0, %s144
      %s159 = sphi 0, %s145
      %s163 = sphi 0, %s163
      %s165 = sphi 0, %s163
      %s166 = sphi 0, %s165
      %s180 = sphi 0, %s166
      %s184 = sphi 0, %s184
      %s186 = sphi 0, %s184
      %s187 = sphi 0, %s186
      %s201 = sphi 0, %s187
      %s209 = sphi 0, %s211
      %s212 = sphi 0, %s209
      %s213 = sphi 0, %s212
      %s229 = sphi 0, %s213
    $region4: #{tpu_custom_call.1} parent=1 // loop_header_branch
      %24 = sbr.rel (%p22) target = $region8
    $region5: #{tpu_custom_call.1} parent=1 // loop_body
      %s26 = ssub.s32 %s21, 1
      %s27 = ssub.s32 %s21, 2
      %s34 = sadd.s32 1, %s29
      %p35 = scmp.ge.s32.totalorder %s34, 1
      %s36 = scalar_select %p35, 0, %s34
      %s37 = sadd.s32 1, %s28
      %s38 = scalar_select %p35, %s37, %s28
      %p39 = scmp.ge.s32.totalorder %s38, 2
      %s40 = scalar_select %p39, 0, %s38
      %s41 = ssub.s32 %s28, %s40
      %s42 = ssub.s32 %s29, %s36
      %s43 = sor.u32 %s41, %s42
      %p44 = scmp.eq.s32.totalorder %s43, 0
      %s46 = sadd.s32 %s45, 1
      %s47 = scalar_select %p44, %s45, %s46
      %p50 = pneg %p44
      %p51 = scmp.eq.s32.totalorder %s21, 1
      %p52 = por %p50, %p51
      %p53 = scmp.ne.s32.totalorder %s45, %s48
      %p54 = scmp.eq.s32.totalorder %s21, 0
      %p55 = por %p53, %p54
      %p56 = scmp.ne.s32.totalorder %s45, %s48
      %p57 = scmp.eq.s32.totalorder %s26, 1
      %p58 = por %p56, %p57
      %p59 = scmp.ne.s32.totalorder %s48, %s49
      %p60 = scmp.eq.s32.totalorder %s26, 0
      %p61 = por %p59, %p60
      %p62 = scmp.ne.s32.totalorder %s48, %s49
      %p63 = scmp.eq.s32.totalorder %s27, 1
      %p64 = por %p62, %p63
      %p66 = scmp.ne.s32.totalorder %s49, %s65
      %p67 = scmp.eq.s32.totalorder %s27, 0
      %p68 = por %p66, %p67
      %s69 = ssub.s32 %s28, %s40
      %p70 = scmp.eq.s32.totalorder %s69, 0
      %s72 = sadd.s32 %s71, 1
      %s73 = scalar_select %p70, %s71, %s72
      %p76 = pneg %p70
      %p77 = scmp.eq.s32.totalorder %s21, 1
      %p78 = por %p76, %p77
      %p79 = scmp.ne.s32.totalorder %s71, %s74
      %p80 = scmp.eq.s32.totalorder %s21, 0
      %p81 = por %p79, %p80
      %p82 = scmp.ne.s32.totalorder %s71, %s74
      %p83 = scmp.eq.s32.totalorder %s26, 1
      %p84 = por %p82, %p83
      %p85 = scmp.ne.s32.totalorder %s74, %s75
      %p86 = scmp.eq.s32.totalorder %s26, 0
      %p87 = por %p85, %p86
      %p88 = scmp.ne.s32.totalorder %s74, %s75
      %p89 = scmp.eq.s32.totalorder %s27, 1
      %p90 = por %p88, %p89
      %p92 = scmp.ne.s32.totalorder %s75, %s91
      %p93 = scmp.eq.s32.totalorder %s27, 0
      %p94 = por %p92, %p93
      %s95 = ssub.s32 %s28, %s40
      %p96 = scmp.eq.s32.totalorder %s95, 0
      %s98 = sadd.s32 %s97, 1
      %s99 = scalar_select %p96, %s97, %s98
      %p102 = pneg %p96
      %p103 = scmp.eq.s32.totalorder %s21, 1
      %p104 = por %p102, %p103
      %p105 = scmp.ne.s32.totalorder %s97, %s100
      %p106 = scmp.eq.s32.totalorder %s21, 0
      %p107 = por %p105, %p106
      %p108 = scmp.ne.s32.totalorder %s97, %s100
      %p109 = scmp.eq.s32.totalorder %s26, 1
      %p110 = por %p108, %p109
      %p111 = scmp.ne.s32.totalorder %s100, %s101
      %p112 = scmp.eq.s32.totalorder %s26, 0
      %p113 = por %p111, %p112
      %p114 = scmp.ne.s32.totalorder %s100, %s101
      %p115 = scmp.eq.s32.totalorder %s27, 1
      %p116 = por %p114, %p115
      %p118 = scmp.ne.s32.totalorder %s101, %s117
      %p119 = scmp.eq.s32.totalorder %s27, 0
      %p120 = por %p118, %p119
      %s122 = sadd.s32 %s121, 1
      %p125 = scmp.eq.s32.totalorder %s21, 1
      %p126 = scmp.ne.s32.totalorder %s121, %s123
      %p127 = scmp.eq.s32.totalorder %s21, 0
      %p128 = por %p126, %p127
      %p129 = scmp.ne.s32.totalorder %s121, %s123
      %p130 = scmp.eq.s32.totalorder %s26, 1
      %p131 = por %p129, %p130
      %p132 = scmp.ne.s32.totalorder %s123, %s124
      %p133 = scmp.eq.s32.totalorder %s26, 0
      %p134 = por %p132, %p133
      %p135 = scmp.ne.s32.totalorder %s123, %s124
      %p136 = scmp.eq.s32.totalorder %s27, 1
      %p137 = por %p135, %p136
      %p139 = scmp.ne.s32.totalorder %s124, %s138
      %p140 = scmp.eq.s32.totalorder %s27, 0
      %p141 = por %p139, %p140
      %s143 = sadd.s32 %s142, 1
      %p146 = scmp.eq.s32.totalorder %s21, 1
      %p147 = scmp.ne.s32.totalorder %s142, %s144
      %p148 = scmp.eq.s32.totalorder %s21, 0
      %p149 = por %p147, %p148
      %p150 = scmp.ne.s32.totalorder %s142, %s144
      %p151 = scmp.eq.s32.totalorder %s26, 1
      %p152 = por %p150, %p151
      %p153 = scmp.ne.s32.totalorder %s144, %s145
      %p154 = scmp.eq.s32.totalorder %s26, 0
      %p155 = por %p153, %p154
      %p156 = scmp.ne.s32.totalorder %s144, %s145
      %p157 = scmp.eq.s32.totalorder %s27, 1
      %p158 = por %p156, %p157
      %p160 = scmp.ne.s32.totalorder %s145, %s159
      %p161 = scmp.eq.s32.totalorder %s27, 0
      %p162 = por %p160, %p161
      %s164 = sadd.s32 %s163, 1
      %p167 = scmp.eq.s32.totalorder %s21, 1
      %p168 = scmp.ne.s32.totalorder %s163, %s165
      %p169 = scmp.eq.s32.totalorder %s21, 0
      %p170 = por %p168, %p169
      %p171 = scmp.ne.s32.totalorder %s163, %s165
      %p172 = scmp.eq.s32.totalorder %s26, 1
      %p173 = por %p171, %p172
      %p174 = scmp.ne.s32.totalorder %s165, %s166
      %p175 = scmp.eq.s32.totalorder %s26, 0
      %p176 = por %p174, %p175
      %p177 = scmp.ne.s32.totalorder %s165, %s166
      %p178 = scmp.eq.s32.totalorder %s27, 1
      %p179 = por %p177, %p178
      %p181 = scmp.ne.s32.totalorder %s166, %s180
      %p182 = scmp.eq.s32.totalorder %s27, 0
      %p183 = por %p181, %p182
      %s185 = sadd.s32 %s184, 1
      %p188 = scmp.eq.s32.totalorder %s21, 1
      %p189 = scmp.ne.s32.totalorder %s184, %s186
      %p190 = scmp.eq.s32.totalorder %s21, 0
      %p191 = por %p189, %p190
      %p192 = scmp.ne.s32.totalorder %s184, %s186
      %p193 = scmp.eq.s32.totalorder %s26, 1
      %p194 = por %p192, %p193
      %p195 = scmp.ne.s32.totalorder %s186, %s187
      %p196 = scmp.eq.s32.totalorder %s26, 0
      %p197 = por %p195, %p196
      %p198 = scmp.ne.s32.totalorder %s186, %s187
      %p199 = scmp.eq.s32.totalorder %s27, 1
      %p200 = por %p198, %p199
      %p202 = scmp.ne.s32.totalorder %s187, %s201
      %p203 = scmp.eq.s32.totalorder %s27, 0
      %p204 = por %p202, %p203
      %s205 = ssub.s32 %s28, %s40
      %s206 = ssub.s32 %s29, %s36
      %s207 = sor.u32 %s205, %s206
      %p208 = scmp.eq.s32.totalorder %s207, 0
      %s210 = sadd.s32 %s209, 1
      %s211 = scalar_select %p208, %s209, %s210
      %p214 = pneg %p208
      %p215 = scmp.eq.s32.totalorder %s21, 1
      %p216 = por %p214, %p215
      %p217 = scmp.ne.s32.totalorder %s209, %s212
      %p218 = scmp.eq.s32.totalorder %s21, 0
      %p219 = por %p217, %p218
      %p220 = scmp.ne.s32.totalorder %s209, %s212
      %p221 = scmp.eq.s32.totalorder %s26, 1
      %p222 = por %p220, %p221
      %p223 = scmp.ne.s32.totalorder %s212, %s213
      %p224 = scmp.eq.s32.totalorder %s26, 0
      %p225 = por %p223, %p224
      %p226 = scmp.ne.s32.totalorder %s212, %s213
      %p227 = scmp.eq.s32.totalorder %s27, 1
      %p228 = por %p226, %p227
      %p230 = scmp.ne.s32.totalorder %s213, %s229
      %p231 = scmp.eq.s32.totalorder %s27, 0
      %p232 = por %p230, %p231
      %p233 = scmp.le.s32.totalorder 1, %s21
      %p234 = scmp.lt.s32.totalorder %s21, 3
      %p235 = pnand %p233, %p234
      %p236 = pneg %p235
      // Predicated region
      $region9: #{tpu_custom_call.1} parent=5 // pred_check
        _
      $region10: #{tpu_custom_call.1} parent=5 // pred_check_branch
        %238 = sbr.rel (%p235) target = $region12
      $region11: #{tpu_custom_call.1} parent=5 // pred_region
        %s239 = ssub.s32 %s21, 1
        // Predicated region
        $region13: #{tpu_custom_call.1} parent=11 // pred_check
          %p240 = pneg %p87
        $region14: #{tpu_custom_call.1} parent=11 // pred_check_branch
          %242 = sbr.rel (%p240) target = $region16
        $region15: #{tpu_custom_call.1} parent=11 // pred_region
          %s244 = ssub.s32 128, 128
          %245 = vsyncadd [#allocation8], %s244
          %s246 = smul.addr %s30, 128
          %s247 = scalar_lea.hbm %s1, %s246
          %s249 = sshll.u32 [#allocation7], 4
          %s250 = int_to_ptr.vmem [resolvable:$true] %s249
          %252 = dma.hbm_to_vmem [thread:$0]  %s247, 128, %s250, [#allocation8]
        $region16: #{tpu_custom_call.1} parent=11 // pred_fallthru
          _
        // Predicated region
        $region17: #{tpu_custom_call.1} parent=11 // pred_check
          %p253 = pneg %p113
        $region18: #{tpu_custom_call.1} parent=11 // pred_check_branch
          %255 = sbr.rel (%p253) target = $region20
        $region19: #{tpu_custom_call.1} parent=11 // pred_region
          %s257 = ssub.s32 128, 128
          %258 = vsyncadd [#allocation8], %s257
          %s259 = smul.addr %s30, 128
          %s260 = scalar_lea.hbm %s2, %s259
          %s262 = sshll.u32 [#allocation9], 4
          %s263 = int_to_ptr.vmem [resolvable:$true] %s262
          %265 = dma.hbm_to_vmem [thread:$0]  %s260, 128, %s263, [#allocation8]
        $region20: #{tpu_custom_call.1} parent=11 // pred_fallthru
          _
        // Predicated region
        $region21: #{tpu_custom_call.1} parent=11 // pred_check
          %p266 = pneg %p134
        $region22: #{tpu_custom_call.1} parent=11 // pred_check_branch
          %268 = sbr.rel (%p266) target = $region24
        $region23: #{tpu_custom_call.1} parent=11 // pred_region
          %s270 = ssub.s32 512, 512
          %271 = vsyncadd [#allocation11], %s270
          %s272 = sshll.u32 [#allocation10], 4
          %s273 = int_to_ptr.vmem [resolvable:$true] %s272
          %278 = dma.hbm_to_vmem [thread:$0]  %s3, 512, %s273, [#allocation11], 128, 128, 8
        $region24: #{tpu_custom_call.1} parent=11 // pred_fallthru
          _
        // Predicated region
        $region25: #{tpu_custom_call.1} parent=11 // pred_check
          %p279 = pneg %p155
        $region26: #{tpu_custom_call.1} parent=11 // pred_check_branch
          %281 = sbr.rel (%p279) target = $region28
        $region27: #{tpu_custom_call.1} parent=11 // pred_region
          _
        $region28: #{tpu_custom_call.1} parent=11 // pred_fallthru
          _
        // Predicated region
        $region29: #{tpu_custom_call.1} parent=11 // pred_check
          %p282 = pneg %p176
        $region30: #{tpu_custom_call.1} parent=11 // pred_check_branch
          %284 = sbr.rel (%p282) target = $region32
        $region31: #{tpu_custom_call.1} parent=11 // pred_region
          %s286 = ssub.s32 512, 512
          %287 = vsyncadd [#allocation11], %s286
          %s288 = sshll.u32 [#allocation12], 4
          %s289 = int_to_ptr.vmem [resolvable:$true] %s288
          %294 = dma.hbm_to_vmem [thread:$0]  %s5, 512, %s289, [#allocation11], 128, 128, 8
        $region32: #{tpu_custom_call.1} parent=11 // pred_fallthru
          _
        // Predicated region
        $region33: #{tpu_custom_call.1} parent=11 // pred_check
          %p295 = pneg %p197
        $region34: #{tpu_custom_call.1} parent=11 // pred_check_branch
          %297 = sbr.rel (%p295) target = $region36
        $region35: #{tpu_custom_call.1} parent=11 // pred_region
          _
        $region36: #{tpu_custom_call.1} parent=11 // pred_fallthru
          _
      $region12: #{tpu_custom_call.1} parent=5 // pred_fallthru
        _
      %p298 = scmp.lt.s32.totalorder %s21, 2
      // Predicated region
      $region37: #{tpu_custom_call.1} parent=5 // pred_check
        %p299 = pneg %p298
      $region38: #{tpu_custom_call.1} parent=5 // pred_check_branch
        %301 = sbr.rel (%p299) target = $region40
      $region39: #{tpu_custom_call.1} parent=5 // pred_region
        // Predicated region
        $region41: #{tpu_custom_call.1} parent=39 // pred_check
          %p302 = pneg %p55
        $region42: #{tpu_custom_call.1} parent=39 // pred_check_branch
          %304 = sbr.rel (%p302) target = $region44
        $region43: #{tpu_custom_call.1} parent=39 // pred_region
          %s305 = sand.u32 %s45, 1
          %s306 = scalar_lea.sflag [#allocation5], %s305
          %s307 = sand.u32 %s45, 1
          %s308 = smul.addr %s307, 8
          %s309 = scalar_lea.vmem [#allocation4], %s308
          %s311 = ssub.s32 128, 128
          %312 = vsyncadd %s306, %s311
          %s313 = sadd.s32 %s29, %s28
          %s314 = smul.addr %s313, 128
          %s315 = scalar_lea.hbm %s0, %s314
          %s317 = sshll.u32 %s309, 4
          %s318 = int_to_ptr.vmem [resolvable:$true] %s317
          %320 = dma.hbm_to_vmem [thread:$0]  %s315, 128, %s318, %s306
        $region44: #{tpu_custom_call.1} parent=39 // pred_fallthru
          _
      $region40: #{tpu_custom_call.1} parent=5 // pred_fallthru
        _
      %p321 = scmp.le.s32.totalorder 1, %s21
      %p322 = scmp.lt.s32.totalorder %s21, 3
      %p323 = pnand %p321, %p322
      %p324 = pneg %p323
      // Predicated region
      $region45: #{tpu_custom_call.1} parent=5 // pred_check
        _
      $region46: #{tpu_custom_call.1} parent=5 // pred_check_branch
        %326 = sbr.rel (%p323) target = $region48
      $region47: #{tpu_custom_call.1} parent=5 // pred_region
        %s327 = ssub.s32 %s21, 1
        %s328 = sand.u32 %s48, 1
        %s329 = scalar_lea.sflag [#allocation5], %s328
        %s330 = sand.u32 %s48, 1
        %s331 = smul.addr %s330, 8
        %s332 = scalar_lea.vmem [#allocation4], %s331
        // Predicated region
        $region49: #{tpu_custom_call.1} parent=47 // pred_check
          %p333 = pneg %p61
        $region50: #{tpu_custom_call.1} parent=47 // pred_check_branch
          %335 = sbr.rel (%p333) target = $region52
        $region51: #{tpu_custom_call.1} parent=47 // pred_region
          %336 = dma.done %s329, 128
        $region52: #{tpu_custom_call.1} parent=47 // pred_fallthru
          _
        // Predicated region
        $region53: #{tpu_custom_call.1} parent=47 // pred_check
          %p337 = pneg %p87
        $region54: #{tpu_custom_call.1} parent=47 // pred_check_branch
          %339 = sbr.rel (%p337) target = $region56
        $region55: #{tpu_custom_call.1} parent=47 // pred_region
          %340 = dma.done [#allocation8], 128
        $region56: #{tpu_custom_call.1} parent=47 // pred_fallthru
          _
        // Predicated region
        $region57: #{tpu_custom_call.1} parent=47 // pred_check
          %p341 = pneg %p113
        $region58: #{tpu_custom_call.1} parent=47 // pred_check_branch
          %343 = sbr.rel (%p341) target = $region60
        $region59: #{tpu_custom_call.1} parent=47 // pred_region
          %344 = dma.done [#allocation8], 128
        $region60: #{tpu_custom_call.1} parent=47 // pred_fallthru
          _
        // Predicated region
        $region61: #{tpu_custom_call.1} parent=47 // pred_check
          %p345 = pneg %p134
        $region62: #{tpu_custom_call.1} parent=47 // pred_check_branch
          %347 = sbr.rel (%p345) target = $region64
        $region63: #{tpu_custom_call.1} parent=47 // pred_region
          %348 = dma.done [#allocation11], 512
        $region64: #{tpu_custom_call.1} parent=47 // pred_fallthru
          _
        // Predicated region
        $region65: #{tpu_custom_call.1} parent=47 // pred_check
          %p349 = pneg %p176
        $region66: #{tpu_custom_call.1} parent=47 // pred_check_branch
          %351 = sbr.rel (%p349) target = $region68
        $region67: #{tpu_custom_call.1} parent=47 // pred_region
          %352 = dma.done [#allocation11], 512
        $region68: #{tpu_custom_call.1} parent=47 // pred_fallthru
          _
        %s353 = sand.u32 %s48, 1
        %s354 = scalar_lea.sflag [#allocation5], %s353
        %s355 = sand.u32 %s48, 1
        %s356 = smul.addr %s355, 8
        %s357 = scalar_lea.vmem [#allocation4], %s356
        %p358 = pneg %p61
        %p359 = pneg %p58
        %p360 = pneg %p87
        %p361 = pneg %p84
        %p362 = pneg %p113
        %p363 = pneg %p110
        %p364 = pneg %p134
        %p365 = pneg %p131
        %p366 = pneg %p155
        %p367 = pneg %p152
        %p368 = pneg %p176
        %p369 = pneg %p173
        %p370 = pneg %p197
        %p371 = pneg %p194
        %p372 = pneg %p225
        %p373 = pneg %p222
        %s374 = sand.u32 %s212, 1
        %s375 = scalar_lea.sflag [#allocation6], %s374
        %s376 = sand.u32 %s212, 1
        %s377 = smul.addr %s376, 8
        %s378 = scalar_lea.vmem [#allocation13], %s377
        %v379 = vld [vmem:[#allocation10] sm:$0xff]
        %v380 = vld [vmem:[#allocation10 + $0x8] sm:$0xff]
        %v381 = vld [vmem:[#allocation10 + $0x10] sm:$0xff]
        %v382 = vld [vmem:[#allocation10 + $0x18] sm:$0xff]
        %v383 = vld [vmem:[%s4] sm:$0x1]
        %p384 = scmp.eq.s32.totalorder %s31, 0
        // Predicated region
        $region69: #{tpu_custom_call.1} parent=47 // pred_check
          %p385 = pneg %p384
        $region70: #{tpu_custom_call.1} parent=47 // pred_check_branch
          %387 = sbr.rel (%p385) target = $region72
        $region71: #{tpu_custom_call.1} parent=47 // pred_region
          %v388 = vld [vmem:[#allocation7] sm:$0xff]
          %v390 = vlaneseq
          %v391 = vshrl.u32 %v390, 7
          %v392 = vsub.s32 0, %v391
          %v393 = vrot.slane %v383, %v392
          %vm395 = vcmask 261120
          %v397 = vsel %vm395, %v388, 0
          %399 = vmatprep.subr.mxu0 0.0
          %400 = vmatpush1.msra.mxu0 %v379
          %401 = vmatprep.subr.mxu0 0.0
          %402 = vmatpush1.msra.mxu0 %v380
          %403 = vmatprep.subr.mxu0 0.0
          %404 = vmatpush1.msra.mxu0 %v381
          %405 = vmatprep.subr.mxu0 0.0
          %406 = vmatpush1.msra.mxu0 %v382
          %407 = vmatprep.subr.mxu0 0.0
          %408 = vmatpush1.msra.mxu0 0.0
          %409 = vmatprep.subr.mxu0 0.0
          %410 = vmatpush1.msra.mxu0 0.0
          %411 = vmatprep.subr.mxu0 0.0
          %412 = vmatpush1.msra.mxu0 0.0
          %413 = vmatprep.subr.mxu0 0.0
          %414 = vmatpush1.msra.mxu0 0.0
          %415 = vmatprep.subr.mxu0 0.0
          %416 = vmatpush1.msra.mxu0 0.0
          %417 = vmatprep.subr.mxu0 0.0
          %418 = vmatpush1.msra.mxu0 0.0
          %419 = vmatprep.subr.mxu0 0.0
          %420 = vmatpush1.msra.mxu0 0.0
          %421 = vmatprep.subr.mxu0 0.0
          %422 = vmatpush1.msra.mxu0 0.0
          %423 = vmatprep.subr.mxu0 0.0
          %424 = vmatpush1.msra.mxu0 0.0
          %425 = vmatprep.subr.mxu0 0.0
          %426 = vmatpush1.msra.mxu0 0.0
          %427 = vmatprep.subr.mxu0 0.0
          %428 = vmatpush1.msra.mxu0 0.0
          %429 = vmatprep.subr.mxu0 0.0
          %430 = vmatpush1.msra.mxu0 0.0
          %431 = vmatprep.subr.mxu0 0.0
          %432 = vmatpush1.msra.mxu0 0.0
          %433 = vmatprep.subr.mxu0 0.0
          %434 = vmatpush1.msra.mxu0 0.0
          %435 = vmatprep.subr.mxu0 0.0
          %436 = vmatpush1.msra.mxu0 0.0
          %437 = vmatprep.subr.mxu0 0.0
          %438 = vmatpush1.msra.mxu0 0.0
          %439 = vmatprep.subr.mxu0 0.0
          %440 = vmatpush1.msra.mxu0 0.0
          %441 = vmatprep.subr.mxu0 0.0
          %442 = vmatpush1.msra.mxu0 0.0
          %443 = vmatprep.subr.mxu0 0.0
          %444 = vmatpush1.msra.mxu0 0.0
          %445 = vmatprep.subr.mxu0 0.0
          %446 = vmatpush1.msra.mxu0 0.0
          %447 = vmatprep.subr.mxu0 0.0
          %448 = vmatpush1.msra.mxu0 0.0
          %449 = vmatprep.subr.mxu0 0.0
          %450 = vmatpush1.msra.mxu0 0.0
          %451 = vmatprep.subr.mxu0 0.0
          %452 = vmatpush1.msra.mxu0 0.0
          %453 = vmatprep.subr.mxu0 0.0
          %454 = vmatpush1.msra.mxu0 0.0
          %455 = vmatprep.subr.mxu0 0.0
          %456 = vmatpush1.msra.mxu0 0.0
          %457 = vmatprep.subr.mxu0 0.0
          %458 = vmatpush1.msra.mxu0 0.0
          %459 = vmatprep.subr.mxu0 0.0
          %460 = vmatpush1.msra.mxu0 0.0
          %461 = vmatprep.subr.mxu0 0.0
          %462 = vmatpush1.msra.mxu0 0.0
          %463 = vmatprep.mubr.f32.mxu0 0.0
          %464 = vmatmul.mubr.f32.gmra.mrb[0].mxu0 %v397
          %v465 = vpop.f32.mrb[0].mxu0
          %v466 = vadd.f32 %v393, %v465
          %v467 = vpop.f32.mrb[0].mxu0
          %468 = vdwg.mxu0
          %v469 = vld [vmem:[#allocation9] sm:$0xff]
          %v471 = vsel %vm395, %v469, 0
          %473 = vmatprep.subr.mxu0 0.0
          %474 = vmatpush1.msra.mxu0 %v379
          %475 = vmatprep.subr.mxu0 0.0
          %476 = vmatpush1.msra.mxu0 %v380
          %477 = vmatprep.subr.mxu0 0.0
          %478 = vmatpush1.msra.mxu0 %v381
          %479 = vmatprep.subr.mxu0 0.0
          %480 = vmatpush1.msra.mxu0 %v382
          %481 = vmatprep.subr.mxu0 0.0
          %482 = vmatpush1.msra.mxu0 0.0
          %483 = vmatprep.subr.mxu0 0.0
          %484 = vmatpush1.msra.mxu0 0.0
          %485 = vmatprep.subr.mxu0 0.0
          %486 = vmatpush1.msra.mxu0 0.0
          %487 = vmatprep.subr.mxu0 0.0
          %488 = vmatpush1.msra.mxu0 0.0
          %489 = vmatprep.subr.mxu0 0.0
          %490 = vmatpush1.msra.mxu0 0.0
          %491 = vmatprep.subr.mxu0 0.0
          %492 = vmatpush1.msra.mxu0 0.0
          %493 = vmatprep.subr.mxu0 0.0
          %494 = vmatpush1.msra.mxu0 0.0
          %495 = vmatprep.subr.mxu0 0.0
          %496 = vmatpush1.msra.mxu0 0.0
          %497 = vmatprep.subr.mxu0 0.0
          %498 = vmatpush1.msra.mxu0 0.0
          %499 = vmatprep.subr.mxu0 0.0
          %500 = vmatpush1.msra.mxu0 0.0
          %501 = vmatprep.subr.mxu0 0.0
          %502 = vmatpush1.msra.mxu0 0.0
          %503 = vmatprep.subr.mxu0 0.0
          %504 = vmatpush1.msra.mxu0 0.0
          %505 = vmatprep.subr.mxu0 0.0
          %506 = vmatpush1.msra.mxu0 0.0
          %507 = vmatprep.subr.mxu0 0.0
          %508 = vmatpush1.msra.mxu0 0.0
          %509 = vmatprep.subr.mxu0 0.0
          %510 = vmatpush1.msra.mxu0 0.0
          %511 = vmatprep.subr.mxu0 0.0
          %512 = vmatpush1.msra.mxu0 0.0
          %513 = vmatprep.subr.mxu0 0.0
          %514 = vmatpush1.msra.mxu0 0.0
          %515 = vmatprep.subr.mxu0 0.0
          %516 = vmatpush1.msra.mxu0 0.0
          %517 = vmatprep.subr.mxu0 0.0
          %518 = vmatpush1.msra.mxu0 0.0
          %519 = vmatprep.subr.mxu0 0.0
          %520 = vmatpush1.msra.mxu0 0.0
          %521 = vmatprep.subr.mxu0 0.0
          %522 = vmatpush1.msra.mxu0 0.0
          %523 = vmatprep.subr.mxu0 0.0
          %524 = vmatpush1.msra.mxu0 0.0
          %525 = vmatprep.subr.mxu0 0.0
          %526 = vmatpush1.msra.mxu0 0.0
          %527 = vmatprep.subr.mxu0 0.0
          %528 = vmatpush1.msra.mxu0 0.0
          %529 = vmatprep.subr.mxu0 0.0
          %530 = vmatpush1.msra.mxu0 0.0
          %531 = vmatprep.subr.mxu0 0.0
          %532 = vmatpush1.msra.mxu0 0.0
          %533 = vmatprep.subr.mxu0 0.0
          %534 = vmatpush1.msra.mxu0 0.0
          %535 = vmatprep.subr.mxu0 0.0
          %536 = vmatpush1.msra.mxu0 0.0
          %537 = vmatprep.mubr.f32.mxu0 0.0
          %538 = vmatmul.mubr.f32.gmra.mrb[0].mxu0 %v471
          %v539 = vpop.f32.mrb[0].mxu0
          %v540 = vadd.f32 %v393, %v539
          %v541 = vpop.f32.mrb[0].mxu0
          %542 = vdwg.mxu0
          %vm543 = vcmask 64512
          %544 = vst.msk [vmem:[#allocation2] sm:$0xff] %vm543, %v466
          %545 = vst.msk [vmem:[#allocation3] sm:$0xff] %vm543, %v540
          %547 = vrot.lane.b32.xlu0 %v466, 120
          %v548 = vpop.permute.xlu0 %547
          %s550 = scalar_lea.vmem [#allocation2], 8
          %551 = vst.msk [vmem:[%s550] sm:$0xff] %vm543, %v548
          %553 = vrot.lane.b32.xlu0 %v540, 120
          %v554 = vpop.permute.xlu0 %553
          %s556 = scalar_lea.vmem [#allocation3], 8
          %557 = vst.msk [vmem:[%s556] sm:$0xff] %vm543, %v554
          %558 = vrot.lane.b32.xlu0 %v466, 112
          %v559 = vpop.permute.xlu0 %558
          %s561 = scalar_lea.vmem [#allocation2], 16
          %562 = vst.msk [vmem:[%s561] sm:$0xff] %vm543, %v559
          %563 = vrot.lane.b32.xlu0 %v540, 112
          %v564 = vpop.permute.xlu0 %563
          %s566 = scalar_lea.vmem [#allocation3], 16
          %567 = vst.msk [vmem:[%s566] sm:$0xff] %vm543, %v564
          %568 = vrot.lane.b32.xlu0 %v466, 104
          %v569 = vpop.permute.xlu0 %568
          %s571 = scalar_lea.vmem [#allocation2], 24
          %572 = vst.msk [vmem:[%s571] sm:$0xff] %vm543, %v569
          %573 = vrot.lane.b32.xlu0 %v540, 104
          %v574 = vpop.permute.xlu0 %573
          %s576 = scalar_lea.vmem [#allocation3], 24
          %577 = vst.msk [vmem:[%s576] sm:$0xff] %vm543, %v574
        $region72: #{tpu_custom_call.1} parent=47 // pred_fallthru
          _
        %v578 = vld [vmem:[%s332] sm:$0xff]
        %v580 = vlaneseq
        %v581 = vshrl.u32 %v580, 7
        %v582 = vsub.s32 0, %v581
        %v583 = vrot.slane %v383, %v582
        %vm585 = vcmask 261120
        %v587 = vsel %vm585, %v578, 0
        %589 = vmatprep.subr.mxu0 0.0
        %590 = vmatpush1.msra.mxu0 %v379
        %591 = vmatprep.subr.mxu0 0.0
        %592 = vmatpush1.msra.mxu0 %v380
        %593 = vmatprep.subr.mxu0 0.0
        %594 = vmatpush1.msra.mxu0 %v381
        %595 = vmatprep.subr.mxu0 0.0
        %596 = vmatpush1.msra.mxu0 %v382
        %597 = vmatprep.subr.mxu0 0.0
        %598 = vmatpush1.msra.mxu0 0.0
        %599 = vmatprep.subr.mxu0 0.0
        %600 = vmatpush1.msra.mxu0 0.0
        %601 = vmatprep.subr.mxu0 0.0
        %602 = vmatpush1.msra.mxu0 0.0
        %603 = vmatprep.subr.mxu0 0.0
        %604 = vmatpush1.msra.mxu0 0.0
        %605 = vmatprep.subr.mxu0 0.0
        %606 = vmatpush1.msra.mxu0 0.0
        %607 = vmatprep.subr.mxu0 0.0
        %608 = vmatpush1.msra.mxu0 0.0
        %609 = vmatprep.subr.mxu0 0.0
        %610 = vmatpush1.msra.mxu0 0.0
        %611 = vmatprep.subr.mxu0 0.0
        %612 = vmatpush1.msra.mxu0 0.0
        %613 = vmatprep.subr.mxu0 0.0
        %614 = vmatpush1.msra.mxu0 0.0
        %615 = vmatprep.subr.mxu0 0.0
        %616 = vmatpush1.msra.mxu0 0.0
        %617 = vmatprep.subr.mxu0 0.0
        %618 = vmatpush1.msra.mxu0 0.0
        %619 = vmatprep.subr.mxu0 0.0
        %620 = vmatpush1.msra.mxu0 0.0
        %621 = vmatprep.subr.mxu0 0.0
        %622 = vmatpush1.msra.mxu0 0.0
        %623 = vmatprep.subr.mxu0 0.0
        %624 = vmatpush1.msra.mxu0 0.0
        %625 = vmatprep.subr.mxu0 0.0
        %626 = vmatpush1.msra.mxu0 0.0
        %627 = vmatprep.subr.mxu0 0.0
        %628 = vmatpush1.msra.mxu0 0.0
        %629 = vmatprep.subr.mxu0 0.0
        %630 = vmatpush1.msra.mxu0 0.0
        %631 = vmatprep.subr.mxu0 0.0
        %632 = vmatpush1.msra.mxu0 0.0
        %633 = vmatprep.subr.mxu0 0.0
        %634 = vmatpush1.msra.mxu0 0.0
        %635 = vmatprep.subr.mxu0 0.0
        %636 = vmatpush1.msra.mxu0 0.0
        %637 = vmatprep.subr.mxu0 0.0
        %638 = vmatpush1.msra.mxu0 0.0
        %639 = vmatprep.subr.mxu0 0.0
        %640 = vmatpush1.msra.mxu0 0.0
        %641 = vmatprep.subr.mxu0 0.0
        %642 = vmatpush1.msra.mxu0 0.0
        %643 = vmatprep.subr.mxu0 0.0
        %644 = vmatpush1.msra.mxu0 0.0
        %645 = vmatprep.subr.mxu0 0.0
        %646 = vmatpush1.msra.mxu0 0.0
        %647 = vmatprep.subr.mxu0 0.0
        %648 = vmatpush1.msra.mxu0 0.0
        %649 = vmatprep.subr.mxu0 0.0
        %650 = vmatpush1.msra.mxu0 0.0
        %651 = vmatprep.subr.mxu0 0.0
        %652 = vmatpush1.msra.mxu0 0.0
        %653 = vmatprep.mubr.f32.mxu0 0.0
        %654 = vmatmul.mubr.f32.gmra.mrb[0].mxu0 %v587
        %v655 = vpop.f32.mrb[0].mxu0
        %v656 = vadd.f32 %v583, %v655
        %v657 = vpop.f32.mrb[0].mxu0
        %658 = vdwg.mxu0
        %v659 = vmul.f32 %v656, 0.35355338
        %v660 = vld [vmem:[#allocation2] sm:$0xff]
        %v661 = vld [vmem:[#allocation3] sm:$0xff]
        %vm662 = vcmask 64512
        %v664 = vsel %vm662, %v659, 0
        %v667 = vsel %vm662, %v660, 0
        %669 = vmatprep.subr.mxu0 0.0
        %670 = vmatpush1.xpose.msra.mxu0 %v667
        %671 = vmatprep.subr.mxu0 0.0
        %672 = vmatpush1.xpose.msra.mxu0 0.0
        %673 = vmatprep.subr.mxu0 0.0
        %674 = vmatpush1.xpose.msra.mxu0 0.0
        %675 = vmatprep.subr.mxu0 0.0
        %676 = vmatpush1.xpose.msra.mxu0 0.0
        %677 = vmatprep.subr.mxu0 0.0
        %678 = vmatpush1.xpose.msra.mxu0 0.0
        %679 = vmatprep.subr.mxu0 0.0
        %680 = vmatpush1.xpose.msra.mxu0 0.0
        %681 = vmatprep.subr.mxu0 0.0
        %682 = vmatpush1.xpose.msra.mxu0 0.0
        %683 = vmatprep.subr.mxu0 0.0
        %684 = vmatpush1.xpose.msra.mxu0 0.0
        %685 = vmatprep.subr.mxu0 0.0
        %686 = vmatpush1.xpose.msra.mxu0 0.0
        %687 = vmatprep.subr.mxu0 0.0
        %688 = vmatpush1.xpose.msra.mxu0 0.0
        %689 = vmatprep.subr.mxu0 0.0
        %690 = vmatpush1.xpose.msra.mxu0 0.0
        %691 = vmatprep.subr.mxu0 0.0
        %692 = vmatpush1.xpose.msra.mxu0 0.0
        %693 = vmatprep.subr.mxu0 0.0
        %694 = vmatpush1.xpose.msra.mxu0 0.0
        %695 = vmatprep.subr.mxu0 0.0
        %696 = vmatpush1.xpose.msra.mxu0 0.0
        %697 = vmatprep.subr.mxu0 0.0
        %698 = vmatpush1.xpose.msra.mxu0 0.0
        %699 = vmatprep.subr.mxu0 0.0
        %700 = vmatpush1.xpose.msra.mxu0 0.0
        %701 = vmatprep.subr.mxu0 0.0
        %702 = vmatpush1.xpose.msra.mxu0 0.0
        %703 = vmatprep.subr.mxu0 0.0
        %704 = vmatpush1.xpose.msra.mxu0 0.0
        %705 = vmatprep.subr.mxu0 0.0
        %706 = vmatpush1.xpose.msra.mxu0 0.0
        %707 = vmatprep.subr.mxu0 0.0
        %708 = vmatpush1.xpose.msra.mxu0 0.0
        %709 = vmatprep.subr.mxu0 0.0
        %710 = vmatpush1.xpose.msra.mxu0 0.0
        %711 = vmatprep.subr.mxu0 0.0
        %712 = vmatpush1.xpose.msra.mxu0 0.0
        %713 = vmatprep.subr.mxu0 0.0
        %714 = vmatpush1.xpose.msra.mxu0 0.0
        %715 = vmatprep.subr.mxu0 0.0
        %716 = vmatpush1.xpose.msra.mxu0 0.0
        %717 = vmatprep.subr.mxu0 0.0
        %718 = vmatpush1.xpose.msra.mxu0 0.0
        %719 = vmatprep.subr.mxu0 0.0
        %720 = vmatpush1.xpose.msra.mxu0 0.0
        %721 = vmatprep.subr.mxu0 0.0
        %722 = vmatpush1.xpose.msra.mxu0 0.0
        %723 = vmatprep.subr.mxu0 0.0
        %724 = vmatpush1.xpose.msra.mxu0 0.0
        %725 = vmatprep.subr.mxu0 0.0
        %726 = vmatpush1.xpose.msra.mxu0 0.0
        %727 = vmatprep.subr.mxu0 0.0
        %728 = vmatpush1.xpose.msra.mxu0 0.0
        %729 = vmatprep.subr.mxu0 0.0
        %730 = vmatpush1.xpose.msra.mxu0 0.0
        %731 = vmatprep.subr.mxu0 0.0
        %732 = vmatpush1.xpose.msra.mxu0 0.0
        %733 = vmatprep.mubr.f32.mxu0 0.0
        %734 = vmatmul.mubr.f32.gmra.mrb[0].mxu0 %v664
        %v735 = vpop.f32.mrb[0].mxu0
        %v736 = vadd.f32 0.0, %v735
        %v737 = vpop.f32.mrb[0].mxu0
        %738 = vdwg.mxu0
        %v739 = vsel %vm662, %v736, -inf
        %740 = vmax.xlane.f32.xlu0 %v739
        %v741 = vpop.xlane.xlu0 %740
        %v742 = vsub.f32 %v736, %v741
        %v743 = vmul.f32 %v742, 1.442695
        %v744 = vpow.pop %v743
        %v745 = vsel %vm662, %v744, 0.0
        %746 = vadd.xlane.f32.xlu0 %v745
        %v747 = vpop.xlane.xlu0 %746
        %v749 = vsel %vm662, %v744, 0
        %751 = vmatprep.subr.mxu0 0.0
        %752 = vmatpush1.msra.mxu0 %v661
        %753 = vmatprep.subr.mxu0 0.0
        %754 = vmatpush1.msra.mxu0 0.0
        %755 = vmatprep.subr.mxu0 0.0
        %756 = vmatpush1.msra.mxu0 0.0
        %757 = vmatprep.subr.mxu0 0.0
        %758 = vmatpush1.msra.mxu0 0.0
        %759 = vmatprep.subr.mxu0 0.0
        %760 = vmatpush1.msra.mxu0 0.0
        %761 = vmatprep.subr.mxu0 0.0
        %762 = vmatpush1.msra.mxu0 0.0
        %763 = vmatprep.subr.mxu0 0.0
        %764 = vmatpush1.msra.mxu0 0.0
        %765 = vmatprep.subr.mxu0 0.0
        %766 = vmatpush1.msra.mxu0 0.0
        %767 = vmatprep.subr.mxu0 0.0
        %768 = vmatpush1.msra.mxu0 0.0
        %769 = vmatprep.subr.mxu0 0.0
        %770 = vmatpush1.msra.mxu0 0.0
        %771 = vmatprep.subr.mxu0 0.0
        %772 = vmatpush1.msra.mxu0 0.0
        %773 = vmatprep.subr.mxu0 0.0
        %774 = vmatpush1.msra.mxu0 0.0
        %775 = vmatprep.subr.mxu0 0.0
        %776 = vmatpush1.msra.mxu0 0.0
        %777 = vmatprep.subr.mxu0 0.0
        %778 = vmatpush1.msra.mxu0 0.0
        %779 = vmatprep.subr.mxu0 0.0
        %780 = vmatpush1.msra.mxu0 0.0
        %781 = vmatprep.subr.mxu0 0.0
        %782 = vmatpush1.msra.mxu0 0.0
        %783 = vmatprep.subr.mxu0 0.0
        %784 = vmatpush1.msra.mxu0 0.0
        %785 = vmatprep.subr.mxu0 0.0
        %786 = vmatpush1.msra.mxu0 0.0
        %787 = vmatprep.subr.mxu0 0.0
        %788 = vmatpush1.msra.mxu0 0.0
        %789 = vmatprep.subr.mxu0 0.0
        %790 = vmatpush1.msra.mxu0 0.0
        %791 = vmatprep.subr.mxu0 0.0
        %792 = vmatpush1.msra.mxu0 0.0
        %793 = vmatprep.subr.mxu0 0.0
        %794 = vmatpush1.msra.mxu0 0.0
        %795 = vmatprep.subr.mxu0 0.0
        %796 = vmatpush1.msra.mxu0 0.0
        %797 = vmatprep.subr.mxu0 0.0
        %798 = vmatpush1.msra.mxu0 0.0
        %799 = vmatprep.subr.mxu0 0.0
        %800 = vmatpush1.msra.mxu0 0.0
        %801 = vmatprep.subr.mxu0 0.0
        %802 = vmatpush1.msra.mxu0 0.0
        %803 = vmatprep.subr.mxu0 0.0
        %804 = vmatpush1.msra.mxu0 0.0
        %805 = vmatprep.subr.mxu0 0.0
        %806 = vmatpush1.msra.mxu0 0.0
        %807 = vmatprep.subr.mxu0 0.0
        %808 = vmatpush1.msra.mxu0 0.0
        %809 = vmatprep.subr.mxu0 0.0
        %810 = vmatpush1.msra.mxu0 0.0
        %811 = vmatprep.subr.mxu0 0.0
        %812 = vmatpush1.msra.mxu0 0.0
        %813 = vmatprep.subr.mxu0 0.0
        %814 = vmatpush1.msra.mxu0 0.0
        %815 = vmatprep.mubr.f32.mxu0 0.0
        %816 = vmatmul.mubr.f32.gmra.mrb[0].mxu0 %v749
        %v817 = vpop.f32.mrb[0].mxu0
        %v818 = vadd.f32 0.0, %v817
        %v819 = vpop.f32.mrb[0].mxu0
        %820 = vdwg.mxu0
        %v821 = vrcp.pop %v747
        %v822 = vmul.f32 %v818, %v821
        %v823 = vld [vmem:[#allocation12] sm:$0xff]
        %s824 = scalar_lea.vmem [#allocation2], 8
        %v825 = vld [vmem:[%s824] sm:$0xff]
        %s826 = scalar_lea.vmem [#allocation3], 8
        %v827 = vld [vmem:[%s826] sm:$0xff]
        %828 = vrot.lane.b32.xlu0 %v659, 120
        %v829 = vpop.permute.xlu0 %828
        %v830 = vsel %vm662, %v829, 0
        %v833 = vsel %vm662, %v825, 0
        %835 = vmatprep.subr.mxu0 0.0
        %836 = vmatpush1.xpose.msra.mxu0 %v833
        %837 = vmatprep.subr.mxu0 0.0
        %838 = vmatpush1.xpose.msra.mxu0 0.0
        %839 = vmatprep.subr.mxu0 0.0
        %840 = vmatpush1.xpose.msra.mxu0 0.0
        %841 = vmatprep.subr.mxu0 0.0
        %842 = vmatpush1.xpose.msra.mxu0 0.0
        %843 = vmatprep.subr.mxu0 0.0
        %844 = vmatpush1.xpose.msra.mxu0 0.0
        %845 = vmatprep.subr.mxu0 0.0
        %846 = vmatpush1.xpose.msra.mxu0 0.0
        %847 = vmatprep.subr.mxu0 0.0
        %848 = vmatpush1.xpose.msra.mxu0 0.0
        %849 = vmatprep.subr.mxu0 0.0
        %850 = vmatpush1.xpose.msra.mxu0 0.0
        %851 = vmatprep.subr.mxu0 0.0
        %852 = vmatpush1.xpose.msra.mxu0 0.0
        %853 = vmatprep.subr.mxu0 0.0
        %854 = vmatpush1.xpose.msra.mxu0 0.0
        %855 = vmatprep.subr.mxu0 0.0
        %856 = vmatpush1.xpose.msra.mxu0 0.0
        %857 = vmatprep.subr.mxu0 0.0
        %858 = vmatpush1.xpose.msra.mxu0 0.0
        %859 = vmatprep.subr.mxu0 0.0
        %860 = vmatpush1.xpose.msra.mxu0 0.0
        %861 = vmatprep.subr.mxu0 0.0
        %862 = vmatpush1.xpose.msra.mxu0 0.0
        %863 = vmatprep.subr.mxu0 0.0
        %864 = vmatpush1.xpose.msra.mxu0 0.0
        %865 = vmatprep.subr.mxu0 0.0
        %866 = vmatpush1.xpose.msra.mxu0 0.0
        %867 = vmatprep.subr.mxu0 0.0
        %868 = vmatpush1.xpose.msra.mxu0 0.0
        %869 = vmatprep.subr.mxu0 0.0
        %870 = vmatpush1.xpose.msra.mxu0 0.0
        %871 = vmatprep.subr.mxu0 0.0
        %872 = vmatpush1.xpose.msra.mxu0 0.0
        %873 = vmatprep.subr.mxu0 0.0
        %874 = vmatpush1.xpose.msra.mxu0 0.0
        %875 = vmatprep.subr.mxu0 0.0
        %876 = vmatpush1.xpose.msra.mxu0 0.0
        %877 = vmatprep.subr.mxu0 0.0
        %878 = vmatpush1.xpose.msra.mxu0 0.0
        %879 = vmatprep.subr.mxu0 0.0
        %880 = vmatpush1.xpose.msra.mxu0 0.0
        %881 = vmatprep.subr.mxu0 0.0
        %882 = vmatpush1.xpose.msra.mxu0 0.0
        %883 = vmatprep.subr.mxu0 0.0
        %884 = vmatpush1.xpose.msra.mxu0 0.0
        %885 = vmatprep.subr.mxu0 0.0
        %886 = vmatpush1.xpose.msra.mxu0 0.0
        %887 = vmatprep.subr.mxu0 0.0
        %888 = vmatpush1.xpose.msra.mxu0 0.0
        %889 = vmatprep.subr.mxu0 0.0
        %890 = vmatpush1.xpose.msra.mxu0 0.0
        %891 = vmatprep.subr.mxu0 0.0
        %892 = vmatpush1.xpose.msra.mxu0 0.0
        %893 = vmatprep.subr.mxu0 0.0
        %894 = vmatpush1.xpose.msra.mxu0 0.0
        %895 = vmatprep.subr.mxu0 0.0
        %896 = vmatpush1.xpose.msra.mxu0 0.0
        %897 = vmatprep.subr.mxu0 0.0
        %898 = vmatpush1.xpose.msra.mxu0 0.0
        %899 = vmatprep.mubr.f32.mxu0 0.0
        %900 = vmatmul.mubr.f32.gmra.mrb[0].mxu0 %v830
        %v901 = vpop.f32.mrb[0].mxu0
        %v902 = vadd.f32 0.0, %v901
        %v903 = vpop.f32.mrb[0].mxu0
        %904 = vdwg.mxu0
        %v905 = vsel %vm662, %v902, -inf
        %906 = vmax.xlane.f32.xlu0 %v905
        %v907 = vpop.xlane.xlu0 %906
        %v908 = vsub.f32 %v902, %v907
        %v909 = vmul.f32 %v908, 1.442695
        %v910 = vpow.pop %v909
        %v911 = vsel %vm662, %v910, 0.0
        %912 = vadd.xlane.f32.xlu0 %v911
        %v913 = vpop.xlane.xlu0 %912
        %v915 = vsel %vm662, %v910, 0
        %917 = vmatprep.subr.mxu0 0.0
        %918 = vmatpush1.msra.mxu0 %v827
        %919 = vmatprep.subr.mxu0 0.0
        %920 = vmatpush1.msra.mxu0 0.0
        %921 = vmatprep.subr.mxu0 0.0
        %922 = vmatpush1.msra.mxu0 0.0
        %923 = vmatprep.subr.mxu0 0.0
        %924 = vmatpush1.msra.mxu0 0.0
        %925 = vmatprep.subr.mxu0 0.0
        %926 = vmatpush1.msra.mxu0 0.0
        %927 = vmatprep.subr.mxu0 0.0
        %928 = vmatpush1.msra.mxu0 0.0
        %929 = vmatprep.subr.mxu0 0.0
        %930 = vmatpush1.msra.mxu0 0.0
        %931 = vmatprep.subr.mxu0 0.0
        %932 = vmatpush1.msra.mxu0 0.0
        %933 = vmatprep.subr.mxu0 0.0
        %934 = vmatpush1.msra.mxu0 0.0
        %935 = vmatprep.subr.mxu0 0.0
        %936 = vmatpush1.msra.mxu0 0.0
        %937 = vmatprep.subr.mxu0 0.0
        %938 = vmatpush1.msra.mxu0 0.0
        %939 = vmatprep.subr.mxu0 0.0
        %940 = vmatpush1.msra.mxu0 0.0
        %941 = vmatprep.subr.mxu0 0.0
        %942 = vmatpush1.msra.mxu0 0.0
        %943 = vmatprep.subr.mxu0 0.0
        %944 = vmatpush1.msra.mxu0 0.0
        %945 = vmatprep.subr.mxu0 0.0
        %946 = vmatpush1.msra.mxu0 0.0
        %947 = vmatprep.subr.mxu0 0.0
        %948 = vmatpush1.msra.mxu0 0.0
        %949 = vmatprep.subr.mxu0 0.0
        %950 = vmatpush1.msra.mxu0 0.0
        %951 = vmatprep.subr.mxu0 0.0
        %952 = vmatpush1.msra.mxu0 0.0
        %953 = vmatprep.subr.mxu0 0.0
        %954 = vmatpush1.msra.mxu0 0.0
        %955 = vmatprep.subr.mxu0 0.0
        %956 = vmatpush1.msra.mxu0 0.0
        %957 = vmatprep.subr.mxu0 0.0
        %958 = vmatpush1.msra.mxu0 0.0
        %959 = vmatprep.subr.mxu0 0.0
        %960 = vmatpush1.msra.mxu0 0.0
        %961 = vmatprep.subr.mxu0 0.0
        %962 = vmatpush1.msra.mxu0 0.0
        %963 = vmatprep.subr.mxu0 0.0
        %964 = vmatpush1.msra.mxu0 0.0
        %965 = vmatprep.subr.mxu0 0.0
        %966 = vmatpush1.msra.mxu0 0.0
        %967 = vmatprep.subr.mxu0 0.0
        %968 = vmatpush1.msra.mxu0 0.0
        %969 = vmatprep.subr.mxu0 0.0
        %970 = vmatpush1.msra.mxu0 0.0
        %971 = vmatprep.subr.mxu0 0.0
        %972 = vmatpush1.msra.mxu0 0.0
        %973 = vmatprep.subr.mxu0 0.0
        %974 = vmatpush1.msra.mxu0 0.0
        %975 = vmatprep.subr.mxu0 0.0
        %976 = vmatpush1.msra.mxu0 0.0
        %977 = vmatprep.subr.mxu0 0.0
        %978 = vmatpush1.msra.mxu0 0.0
        %979 = vmatprep.subr.mxu0 0.0
        %980 = vmatpush1.msra.mxu0 0.0
        %981 = vmatprep.mubr.f32.mxu0 0.0
        %982 = vmatmul.mubr.f32.gmra.mrb[0].mxu0 %v915
        %v983 = vpop.f32.mrb[0].mxu0
        %v984 = vadd.f32 0.0, %v983
        %v985 = vpop.f32.mrb[0].mxu0
        %986 = vdwg.mxu0
        %v987 = vrcp.pop %v913
        %v988 = vmul.f32 %v984, %v987
        %s989 = scalar_lea.vmem [#allocation12], 8
        %v990 = vld [vmem:[%s989] sm:$0xff]
        %v992 = vsel %vm662, %v988, 0
        %994 = vmatprep.subr.mxu0 0.0
        %995 = vmatpush1.msra.mxu0 %v990
        %996 = vmatprep.subr.mxu0 0.0
        %997 = vmatpush1.msra.mxu0 0.0
        %998 = vmatprep.subr.mxu0 0.0
        %999 = vmatpush1.msra.mxu0 0.0
        %1000 = vmatprep.subr.mxu0 0.0
        %1001 = vmatpush1.msra.mxu0 0.0
        %1002 = vmatprep.subr.mxu0 0.0
        %1003 = vmatpush1.msra.mxu0 0.0
        %1004 = vmatprep.subr.mxu0 0.0
        %1005 = vmatpush1.msra.mxu0 0.0
        %1006 = vmatprep.subr.mxu0 0.0
        %1007 = vmatpush1.msra.mxu0 0.0
        %1008 = vmatprep.subr.mxu0 0.0
        %1009 = vmatpush1.msra.mxu0 0.0
        %1010 = vmatprep.subr.mxu0 0.0
        %1011 = vmatpush1.msra.mxu0 0.0
        %1012 = vmatprep.subr.mxu0 0.0
        %1013 = vmatpush1.msra.mxu0 0.0
        %1014 = vmatprep.subr.mxu0 0.0
        %1015 = vmatpush1.msra.mxu0 0.0
        %1016 = vmatprep.subr.mxu0 0.0
        %1017 = vmatpush1.msra.mxu0 0.0
        %1018 = vmatprep.subr.mxu0 0.0
        %1019 = vmatpush1.msra.mxu0 0.0
        %1020 = vmatprep.subr.mxu0 0.0
        %1021 = vmatpush1.msra.mxu0 0.0
        %1022 = vmatprep.subr.mxu0 0.0
        %1023 = vmatpush1.msra.mxu0 0.0
        %1024 = vmatprep.subr.mxu0 0.0
        %1025 = vmatpush1.msra.mxu0 0.0
        %1026 = vmatprep.subr.mxu0 0.0
        %1027 = vmatpush1.msra.mxu0 0.0
        %1028 = vmatprep.subr.mxu0 0.0
        %1029 = vmatpush1.msra.mxu0 0.0
        %1030 = vmatprep.subr.mxu0 0.0
        %1031 = vmatpush1.msra.mxu0 0.0
        %1032 = vmatprep.subr.mxu0 0.0
        %1033 = vmatpush1.msra.mxu0 0.0
        %1034 = vmatprep.subr.mxu0 0.0
        %1035 = vmatpush1.msra.mxu0 0.0
        %1036 = vmatprep.subr.mxu0 0.0
        %1037 = vmatpush1.msra.mxu0 0.0
        %1038 = vmatprep.subr.mxu0 0.0
        %1039 = vmatpush1.msra.mxu0 0.0
        %1040 = vmatprep.subr.mxu0 0.0
        %1041 = vmatpush1.msra.mxu0 0.0
        %1042 = vmatprep.subr.mxu0 0.0
        %1043 = vmatpush1.msra.mxu0 0.0
        %1044 = vmatprep.subr.mxu0 0.0
        %1045 = vmatpush1.msra.mxu0 0.0
        %1046 = vmatprep.subr.mxu0 0.0
        %1047 = vmatpush1.msra.mxu0 0.0
        %1048 = vmatprep.subr.mxu0 0.0
        %1049 = vmatpush1.msra.mxu0 0.0
        %1050 = vmatprep.subr.mxu0 0.0
        %1051 = vmatpush1.msra.mxu0 0.0
        %1052 = vmatprep.subr.mxu0 0.0
        %1053 = vmatpush1.msra.mxu0 0.0
        %1054 = vmatprep.subr.mxu0 0.0
        %1055 = vmatpush1.msra.mxu0 0.0
        %1056 = vmatprep.subr.mxu0 0.0
        %1057 = vmatpush1.msra.mxu0 0.0
        %1058 = vmatprep.mubr.f32.mxu0 0.0
        %1059 = vmatmul.mubr.f32.gmra.mrb[0].mxu0 %v992
        %v1060 = vpop.f32.mrb[0].mxu0
        %v1061 = vadd.f32 0.0, %v1060
        %v1062 = vpop.f32.mrb[0].mxu0
        %1063 = vdwg.mxu0
        %v1065 = vsel %vm662, %v822, 0
        %1067 = vmatprep.subr.mxu0 0.0
        %1068 = vmatpush1.msra.mxu0 %v823
        %1069 = vmatprep.subr.mxu0 0.0
        %1070 = vmatpush1.msra.mxu0 0.0
        %1071 = vmatprep.subr.mxu0 0.0
        %1072 = vmatpush1.msra.mxu0 0.0
        %1073 = vmatprep.subr.mxu0 0.0
        %1074 = vmatpush1.msra.mxu0 0.0
        %1075 = vmatprep.subr.mxu0 0.0
        %1076 = vmatpush1.msra.mxu0 0.0
        %1077 = vmatprep.subr.mxu0 0.0
        %1078 = vmatpush1.msra.mxu0 0.0
        %1079 = vmatprep.subr.mxu0 0.0
        %1080 = vmatpush1.msra.mxu0 0.0
        %1081 = vmatprep.subr.mxu0 0.0
        %1082 = vmatpush1.msra.mxu0 0.0
        %1083 = vmatprep.subr.mxu0 0.0
        %1084 = vmatpush1.msra.mxu0 0.0
        %1085 = vmatprep.subr.mxu0 0.0
        %1086 = vmatpush1.msra.mxu0 0.0
        %1087 = vmatprep.subr.mxu0 0.0
        %1088 = vmatpush1.msra.mxu0 0.0
        %1089 = vmatprep.subr.mxu0 0.0
        %1090 = vmatpush1.msra.mxu0 0.0
        %1091 = vmatprep.subr.mxu0 0.0
        %1092 = vmatpush1.msra.mxu0 0.0
        %1093 = vmatprep.subr.mxu0 0.0
        %1094 = vmatpush1.msra.mxu0 0.0
        %1095 = vmatprep.subr.mxu0 0.0
        %1096 = vmatpush1.msra.mxu0 0.0
        %1097 = vmatprep.subr.mxu0 0.0
        %1098 = vmatpush1.msra.mxu0 0.0
        %1099 = vmatprep.subr.mxu0 0.0
        %1100 = vmatpush1.msra.mxu0 0.0
        %1101 = vmatprep.subr.mxu0 0.0
        %1102 = vmatpush1.msra.mxu0 0.0
        %1103 = vmatprep.subr.mxu0 0.0
        %1104 = vmatpush1.msra.mxu0 0.0
        %1105 = vmatprep.subr.mxu0 0.0
        %1106 = vmatpush1.msra.mxu0 0.0
        %1107 = vmatprep.subr.mxu0 0.0
        %1108 = vmatpush1.msra.mxu0 0.0
        %1109 = vmatprep.subr.mxu0 0.0
        %1110 = vmatpush1.msra.mxu0 0.0
        %1111 = vmatprep.subr.mxu0 0.0
        %1112 = vmatpush1.msra.mxu0 0.0
        %1113 = vmatprep.subr.mxu0 0.0
        %1114 = vmatpush1.msra.mxu0 0.0
        %1115 = vmatprep.subr.mxu0 0.0
        %1116 = vmatpush1.msra.mxu0 0.0
        %1117 = vmatprep.subr.mxu0 0.0
        %1118 = vmatpush1.msra.mxu0 0.0
        %1119 = vmatprep.subr.mxu0 0.0
        %1120 = vmatpush1.msra.mxu0 0.0
        %1121 = vmatprep.subr.mxu0 0.0
        %1122 = vmatpush1.msra.mxu0 0.0
        %1123 = vmatprep.subr.mxu0 0.0
        %1124 = vmatpush1.msra.mxu0 0.0
        %1125 = vmatprep.subr.mxu0 0.0
        %1126 = vmatpush1.msra.mxu0 0.0
        %1127 = vmatprep.subr.mxu0 0.0
        %1128 = vmatpush1.msra.mxu0 0.0
        %1129 = vmatprep.subr.mxu0 0.0
        %1130 = vmatpush1.msra.mxu0 0.0
        %1131 = vmatprep.mubr.f32.mxu0 0.0
        %1132 = vmatmul.mubr.f32.gmra.mrb[0].mxu0 %v1065
        %v1133 = vpop.f32.mrb[0].mxu0
        %v1134 = vadd.f32 %v1061, %v1133
        %v1135 = vpop.f32.mrb[0].mxu0
        %1136 = vdwg.mxu0
        %s1137 = scalar_lea.vmem [#allocation2], 16
        %v1138 = vld [vmem:[%s1137] sm:$0xff]
        %s1139 = scalar_lea.vmem [#allocation3], 16
        %v1140 = vld [vmem:[%s1139] sm:$0xff]
        %1141 = vrot.lane.b32.xlu0 %v659, 112
        %v1142 = vpop.permute.xlu0 %1141
        %v1143 = vsel %vm662, %v1142, 0
        %v1146 = vsel %vm662, %v1138, 0
        %1148 = vmatprep.subr.mxu0 0.0
        %1149 = vmatpush1.xpose.msra.mxu0 %v1146
        %1150 = vmatprep.subr.mxu0 0.0
        %1151 = vmatpush1.xpose.msra.mxu0 0.0
        %1152 = vmatprep.subr.mxu0 0.0
        %1153 = vmatpush1.xpose.msra.mxu0 0.0
        %1154 = vmatprep.subr.mxu0 0.0
        %1155 = vmatpush1.xpose.msra.mxu0 0.0
        %1156 = vmatprep.subr.mxu0 0.0
        %1157 = vmatpush1.xpose.msra.mxu0 0.0
        %1158 = vmatprep.subr.mxu0 0.0
        %1159 = vmatpush1.xpose.msra.mxu0 0.0
        %1160 = vmatprep.subr.mxu0 0.0
        %1161 = vmatpush1.xpose.msra.mxu0 0.0
        %1162 = vmatprep.subr.mxu0 0.0
        %1163 = vmatpush1.xpose.msra.mxu0 0.0
        %1164 = vmatprep.subr.mxu0 0.0
        %1165 = vmatpush1.xpose.msra.mxu0 0.0
        %1166 = vmatprep.subr.mxu0 0.0
        %1167 = vmatpush1.xpose.msra.mxu0 0.0
        %1168 = vmatprep.subr.mxu0 0.0
        %1169 = vmatpush1.xpose.msra.mxu0 0.0
        %1170 = vmatprep.subr.mxu0 0.0
        %1171 = vmatpush1.xpose.msra.mxu0 0.0
        %1172 = vmatprep.subr.mxu0 0.0
        %1173 = vmatpush1.xpose.msra.mxu0 0.0
        %1174 = vmatprep.subr.mxu0 0.0
        %1175 = vmatpush1.xpose.msra.mxu0 0.0
        %1176 = vmatprep.subr.mxu0 0.0
        %1177 = vmatpush1.xpose.msra.mxu0 0.0
        %1178 = vmatprep.subr.mxu0 0.0
        %1179 = vmatpush1.xpose.msra.mxu0 0.0
        %1180 = vmatprep.subr.mxu0 0.0
        %1181 = vmatpush1.xpose.msra.mxu0 0.0
        %1182 = vmatprep.subr.mxu0 0.0
        %1183 = vmatpush1.xpose.msra.mxu0 0.0
        %1184 = vmatprep.subr.mxu0 0.0
        %1185 = vmatpush1.xpose.msra.mxu0 0.0
        %1186 = vmatprep.subr.mxu0 0.0
        %1187 = vmatpush1.xpose.msra.mxu0 0.0
        %1188 = vmatprep.subr.mxu0 0.0
        %1189 = vmatpush1.xpose.msra.mxu0 0.0
        %1190 = vmatprep.subr.mxu0 0.0
        %1191 = vmatpush1.xpose.msra.mxu0 0.0
        %1192 = vmatprep.subr.mxu0 0.0
        %1193 = vmatpush1.xpose.msra.mxu0 0.0
        %1194 = vmatprep.subr.mxu0 0.0
        %1195 = vmatpush1.xpose.msra.mxu0 0.0
        %1196 = vmatprep.subr.mxu0 0.0
        %1197 = vmatpush1.xpose.msra.mxu0 0.0
        %1198 = vmatprep.subr.mxu0 0.0
        %1199 = vmatpush1.xpose.msra.mxu0 0.0
        %1200 = vmatprep.subr.mxu0 0.0
        %1201 = vmatpush1.xpose.msra.mxu0 0.0
        %1202 = vmatprep.subr.mxu0 0.0
        %1203 = vmatpush1.xpose.msra.mxu0 0.0
        %1204 = vmatprep.subr.mxu0 0.0
        %1205 = vmatpush1.xpose.msra.mxu0 0.0
        %1206 = vmatprep.subr.mxu0 0.0
        %1207 = vmatpush1.xpose.msra.mxu0 0.0
        %1208 = vmatprep.subr.mxu0 0.0
        %1209 = vmatpush1.xpose.msra.mxu0 0.0
        %1210 = vmatprep.subr.mxu0 0.0
        %1211 = vmatpush1.xpose.msra.mxu0 0.0
        %1212 = vmatprep.mubr.f32.mxu0 0.0
        %1213 = vmatmul.mubr.f32.gmra.mrb[0].mxu0 %v1143
        %v1214 = vpop.f32.mrb[0].mxu0
        %v1215 = vadd.f32 0.0, %v1214
        %v1216 = vpop.f32.mrb[0].mxu0
        %1217 = vdwg.mxu0
        %v1218 = vsel %vm662, %v1215, -inf
        %1219 = vmax.xlane.f32.xlu0 %v1218
        %v1220 = vpop.xlane.xlu0 %1219
        %v1221 = vsub.f32 %v1215, %v1220
        %v1222 = vmul.f32 %v1221, 1.442695
        %v1223 = vpow.pop %v1222
        %v1224 = vsel %vm662, %v1223, 0.0
        %1225 = vadd.xlane.f32.xlu0 %v1224
        %v1226 = vpop.xlane.xlu0 %1225
        %v1228 = vsel %vm662, %v1223, 0
        %1230 = vmatprep.subr.mxu0 0.0
        %1231 = vmatpush1.msra.mxu0 %v1140
        %1232 = vmatprep.subr.mxu0 0.0
        %1233 = vmatpush1.msra.mxu0 0.0
        %1234 = vmatprep.subr.mxu0 0.0
        %1235 = vmatpush1.msra.mxu0 0.0
        %1236 = vmatprep.subr.mxu0 0.0
        %1237 = vmatpush1.msra.mxu0 0.0
        %1238 = vmatprep.subr.mxu0 0.0
        %1239 = vmatpush1.msra.mxu0 0.0
        %1240 = vmatprep.subr.mxu0 0.0
        %1241 = vmatpush1.msra.mxu0 0.0
        %1242 = vmatprep.subr.mxu0 0.0
        %1243 = vmatpush1.msra.mxu0 0.0
        %1244 = vmatprep.subr.mxu0 0.0
        %1245 = vmatpush1.msra.mxu0 0.0
        %1246 = vmatprep.subr.mxu0 0.0
        %1247 = vmatpush1.msra.mxu0 0.0
        %1248 = vmatprep.subr.mxu0 0.0
        %1249 = vmatpush1.msra.mxu0 0.0
        %1250 = vmatprep.subr.mxu0 0.0
        %1251 = vmatpush1.msra.mxu0 0.0
        %1252 = vmatprep.subr.mxu0 0.0
        %1253 = vmatpush1.msra.mxu0 0.0
        %1254 = vmatprep.subr.mxu0 0.0
        %1255 = vmatpush1.msra.mxu0 0.0
        %1256 = vmatprep.subr.mxu0 0.0
        %1257 = vmatpush1.msra.mxu0 0.0
        %1258 = vmatprep.subr.mxu0 0.0
        %1259 = vmatpush1.msra.mxu0 0.0
        %1260 = vmatprep.subr.mxu0 0.0
        %1261 = vmatpush1.msra.mxu0 0.0
        %1262 = vmatprep.subr.mxu0 0.0
        %1263 = vmatpush1.msra.mxu0 0.0
        %1264 = vmatprep.subr.mxu0 0.0
        %1265 = vmatpush1.msra.mxu0 0.0
        %1266 = vmatprep.subr.mxu0 0.0
        %1267 = vmatpush1.msra.mxu0 0.0
        %1268 = vmatprep.subr.mxu0 0.0
        %1269 = vmatpush1.msra.mxu0 0.0
        %1270 = vmatprep.subr.mxu0 0.0
        %1271 = vmatpush1.msra.mxu0 0.0
        %1272 = vmatprep.subr.mxu0 0.0
        %1273 = vmatpush1.msra.mxu0 0.0
        %1274 = vmatprep.subr.mxu0 0.0
        %1275 = vmatpush1.msra.mxu0 0.0
        %1276 = vmatprep.subr.mxu0 0.0
        %1277 = vmatpush1.msra.mxu0 0.0
        %1278 = vmatprep.subr.mxu0 0.0
        %1279 = vmatpush1.msra.mxu0 0.0
        %1280 = vmatprep.subr.mxu0 0.0
        %1281 = vmatpush1.msra.mxu0 0.0
        %1282 = vmatprep.subr.mxu0 0.0
        %1283 = vmatpush1.msra.mxu0 0.0
        %1284 = vmatprep.subr.mxu0 0.0
        %1285 = vmatpush1.msra.mxu0 0.0
        %1286 = vmatprep.subr.mxu0 0.0
        %1287 = vmatpush1.msra.mxu0 0.0
        %1288 = vmatprep.subr.mxu0 0.0
        %1289 = vmatpush1.msra.mxu0 0.0
        %1290 = vmatprep.subr.mxu0 0.0
        %1291 = vmatpush1.msra.mxu0 0.0
        %1292 = vmatprep.subr.mxu0 0.0
        %1293 = vmatpush1.msra.mxu0 0.0
        %1294 = vmatprep.mubr.f32.mxu0 0.0
        %1295 = vmatmul.mubr.f32.gmra.mrb[0].mxu0 %v1228
        %v1296 = vpop.f32.mrb[0].mxu0
        %v1297 = vadd.f32 0.0, %v1296
        %v1298 = vpop.f32.mrb[0].mxu0
        %1299 = vdwg.mxu0
        %v1300 = vrcp.pop %v1226
        %v1301 = vmul.f32 %v1297, %v1300
        %s1302 = scalar_lea.vmem [#allocation12], 16
        %v1303 = vld [vmem:[%s1302] sm:$0xff]
        %v1305 = vsel %vm662, %v1301, 0
        %1307 = vmatprep.subr.mxu0 0.0
        %1308 = vmatpush1.msra.mxu0 %v1303
        %1309 = vmatprep.subr.mxu0 0.0
        %1310 = vmatpush1.msra.mxu0 0.0
        %1311 = vmatprep.subr.mxu0 0.0
        %1312 = vmatpush1.msra.mxu0 0.0
        %1313 = vmatprep.subr.mxu0 0.0
        %1314 = vmatpush1.msra.mxu0 0.0
        %1315 = vmatprep.subr.mxu0 0.0
        %1316 = vmatpush1.msra.mxu0 0.0
        %1317 = vmatprep.subr.mxu0 0.0
        %1318 = vmatpush1.msra.mxu0 0.0
        %1319 = vmatprep.subr.mxu0 0.0
        %1320 = vmatpush1.msra.mxu0 0.0
        %1321 = vmatprep.subr.mxu0 0.0
        %1322 = vmatpush1.msra.mxu0 0.0
        %1323 = vmatprep.subr.mxu0 0.0
        %1324 = vmatpush1.msra.mxu0 0.0
        %1325 = vmatprep.subr.mxu0 0.0
        %1326 = vmatpush1.msra.mxu0 0.0
        %1327 = vmatprep.subr.mxu0 0.0
        %1328 = vmatpush1.msra.mxu0 0.0
        %1329 = vmatprep.subr.mxu0 0.0
        %1330 = vmatpush1.msra.mxu0 0.0
        %1331 = vmatprep.subr.mxu0 0.0
        %1332 = vmatpush1.msra.mxu0 0.0
        %1333 = vmatprep.subr.mxu0 0.0
        %1334 = vmatpush1.msra.mxu0 0.0
        %1335 = vmatprep.subr.mxu0 0.0
        %1336 = vmatpush1.msra.mxu0 0.0
        %1337 = vmatprep.subr.mxu0 0.0
        %1338 = vmatpush1.msra.mxu0 0.0
        %1339 = vmatprep.subr.mxu0 0.0
        %1340 = vmatpush1.msra.mxu0 0.0
        %1341 = vmatprep.subr.mxu0 0.0
        %1342 = vmatpush1.msra.mxu0 0.0
        %1343 = vmatprep.subr.mxu0 0.0
        %1344 = vmatpush1.msra.mxu0 0.0
        %1345 = vmatprep.subr.mxu0 0.0
        %1346 = vmatpush1.msra.mxu0 0.0
        %1347 = vmatprep.subr.mxu0 0.0
        %1348 = vmatpush1.msra.mxu0 0.0
        %1349 = vmatprep.subr.mxu0 0.0
        %1350 = vmatpush1.msra.mxu0 0.0
        %1351 = vmatprep.subr.mxu0 0.0
        %1352 = vmatpush1.msra.mxu0 0.0
        %1353 = vmatprep.subr.mxu0 0.0
        %1354 = vmatpush1.msra.mxu0 0.0
        %1355 = vmatprep.subr.mxu0 0.0
        %1356 = vmatpush1.msra.mxu0 0.0
        %1357 = vmatprep.subr.mxu0 0.0
        %1358 = vmatpush1.msra.mxu0 0.0
        %1359 = vmatprep.subr.mxu0 0.0
        %1360 = vmatpush1.msra.mxu0 0.0
        %1361 = vmatprep.subr.mxu0 0.0
        %1362 = vmatpush1.msra.mxu0 0.0
        %1363 = vmatprep.subr.mxu0 0.0
        %1364 = vmatpush1.msra.mxu0 0.0
        %1365 = vmatprep.subr.mxu0 0.0
        %1366 = vmatpush1.msra.mxu0 0.0
        %1367 = vmatprep.subr.mxu0 0.0
        %1368 = vmatpush1.msra.mxu0 0.0
        %1369 = vmatprep.subr.mxu0 0.0
        %1370 = vmatpush1.msra.mxu0 0.0
        %1371 = vmatprep.mubr.f32.mxu0 0.0
        %1372 = vmatmul.mubr.f32.gmra.mrb[0].mxu0 %v1305
        %v1373 = vpop.f32.mrb[0].mxu0
        %v1374 = vadd.f32 0.0, %v1373
        %v1375 = vpop.f32.mrb[0].mxu0
        %1376 = vdwg.mxu0
        %v1377 = vadd.f32 %v1134, %v1374
        %s1378 = scalar_lea.vmem [#allocation2], 24
        %v1379 = vld [vmem:[%s1378] sm:$0xff]
        %s1380 = scalar_lea.vmem [#allocation3], 24
        %v1381 = vld [vmem:[%s1380] sm:$0xff]
        %1382 = vrot.lane.b32.xlu0 %v659, 104
        %v1383 = vpop.permute.xlu0 %1382
        %v1384 = vsel %vm662, %v1383, 0
        %v1387 = vsel %vm662, %v1379, 0
        %1389 = vmatprep.subr.mxu0 0.0
        %1390 = vmatpush1.xpose.msra.mxu0 %v1387
        %1391 = vmatprep.subr.mxu0 0.0
        %1392 = vmatpush1.xpose.msra.mxu0 0.0
        %1393 = vmatprep.subr.mxu0 0.0
        %1394 = vmatpush1.xpose.msra.mxu0 0.0
        %1395 = vmatprep.subr.mxu0 0.0
        %1396 = vmatpush1.xpose.msra.mxu0 0.0
        %1397 = vmatprep.subr.mxu0 0.0
        %1398 = vmatpush1.xpose.msra.mxu0 0.0
        %1399 = vmatprep.subr.mxu0 0.0
        %1400 = vmatpush1.xpose.msra.mxu0 0.0
        %1401 = vmatprep.subr.mxu0 0.0
        %1402 = vmatpush1.xpose.msra.mxu0 0.0
        %1403 = vmatprep.subr.mxu0 0.0
        %1404 = vmatpush1.xpose.msra.mxu0 0.0
        %1405 = vmatprep.subr.mxu0 0.0
        %1406 = vmatpush1.xpose.msra.mxu0 0.0
        %1407 = vmatprep.subr.mxu0 0.0
        %1408 = vmatpush1.xpose.msra.mxu0 0.0
        %1409 = vmatprep.subr.mxu0 0.0
        %1410 = vmatpush1.xpose.msra.mxu0 0.0
        %1411 = vmatprep.subr.mxu0 0.0
        %1412 = vmatpush1.xpose.msra.mxu0 0.0
        %1413 = vmatprep.subr.mxu0 0.0
        %1414 = vmatpush1.xpose.msra.mxu0 0.0
        %1415 = vmatprep.subr.mxu0 0.0
        %1416 = vmatpush1.xpose.msra.mxu0 0.0
        %1417 = vmatprep.subr.mxu0 0.0
        %1418 = vmatpush1.xpose.msra.mxu0 0.0
        %1419 = vmatprep.subr.mxu0 0.0
        %1420 = vmatpush1.xpose.msra.mxu0 0.0
        %1421 = vmatprep.subr.mxu0 0.0
        %1422 = vmatpush1.xpose.msra.mxu0 0.0
        %1423 = vmatprep.subr.mxu0 0.0
        %1424 = vmatpush1.xpose.msra.mxu0 0.0
        %1425 = vmatprep.subr.mxu0 0.0
        %1426 = vmatpush1.xpose.msra.mxu0 0.0
        %1427 = vmatprep.subr.mxu0 0.0
        %1428 = vmatpush1.xpose.msra.mxu0 0.0
        %1429 = vmatprep.subr.mxu0 0.0
        %1430 = vmatpush1.xpose.msra.mxu0 0.0
        %1431 = vmatprep.subr.mxu0 0.0
        %1432 = vmatpush1.xpose.msra.mxu0 0.0
        %1433 = vmatprep.subr.mxu0 0.0
        %1434 = vmatpush1.xpose.msra.mxu0 0.0
        %1435 = vmatprep.subr.mxu0 0.0
        %1436 = vmatpush1.xpose.msra.mxu0 0.0
        %1437 = vmatprep.subr.mxu0 0.0
        %1438 = vmatpush1.xpose.msra.mxu0 0.0
        %1439 = vmatprep.subr.mxu0 0.0
        %1440 = vmatpush1.xpose.msra.mxu0 0.0
        %1441 = vmatprep.subr.mxu0 0.0
        %1442 = vmatpush1.xpose.msra.mxu0 0.0
        %1443 = vmatprep.subr.mxu0 0.0
        %1444 = vmatpush1.xpose.msra.mxu0 0.0
        %1445 = vmatprep.subr.mxu0 0.0
        %1446 = vmatpush1.xpose.msra.mxu0 0.0
        %1447 = vmatprep.subr.mxu0 0.0
        %1448 = vmatpush1.xpose.msra.mxu0 0.0
        %1449 = vmatprep.subr.mxu0 0.0
        %1450 = vmatpush1.xpose.msra.mxu0 0.0
        %1451 = vmatprep.subr.mxu0 0.0
        %1452 = vmatpush1.xpose.msra.mxu0 0.0
        %1453 = vmatprep.mubr.f32.mxu0 0.0
        %1454 = vmatmul.mubr.f32.gmra.mrb[0].mxu0 %v1384
        %v1455 = vpop.f32.mrb[0].mxu0
        %v1456 = vadd.f32 0.0, %v1455
        %v1457 = vpop.f32.mrb[0].mxu0
        %1458 = vdwg.mxu0
        %v1459 = vsel %vm662, %v1456, -inf
        %1460 = vmax.xlane.f32.xlu0 %v1459
        %v1461 = vpop.xlane.xlu0 %1460
        %v1462 = vsub.f32 %v1456, %v1461
        %v1463 = vmul.f32 %v1462, 1.442695
        %v1464 = vpow.pop %v1463
        %v1465 = vsel %vm662, %v1464, 0.0
        %1466 = vadd.xlane.f32.xlu0 %v1465
        %v1467 = vpop.xlane.xlu0 %1466
        %v1469 = vsel %vm662, %v1464, 0
        %1471 = vmatprep.subr.mxu0 0.0
        %1472 = vmatpush1.msra.mxu0 %v1381
        %1473 = vmatprep.subr.mxu0 0.0
        %1474 = vmatpush1.msra.mxu0 0.0
        %1475 = vmatprep.subr.mxu0 0.0
        %1476 = vmatpush1.msra.mxu0 0.0
        %1477 = vmatprep.subr.mxu0 0.0
        %1478 = vmatpush1.msra.mxu0 0.0
        %1479 = vmatprep.subr.mxu0 0.0
        %1480 = vmatpush1.msra.mxu0 0.0
        %1481 = vmatprep.subr.mxu0 0.0
        %1482 = vmatpush1.msra.mxu0 0.0
        %1483 = vmatprep.subr.mxu0 0.0
        %1484 = vmatpush1.msra.mxu0 0.0
        %1485 = vmatprep.subr.mxu0 0.0
        %1486 = vmatpush1.msra.mxu0 0.0
        %1487 = vmatprep.subr.mxu0 0.0
        %1488 = vmatpush1.msra.mxu0 0.0
        %1489 = vmatprep.subr.mxu0 0.0
        %1490 = vmatpush1.msra.mxu0 0.0
        %1491 = vmatprep.subr.mxu0 0.0
        %1492 = vmatpush1.msra.mxu0 0.0
        %1493 = vmatprep.subr.mxu0 0.0
        %1494 = vmatpush1.msra.mxu0 0.0
        %1495 = vmatprep.subr.mxu0 0.0
        %1496 = vmatpush1.msra.mxu0 0.0
        %1497 = vmatprep.subr.mxu0 0.0
        %1498 = vmatpush1.msra.mxu0 0.0
        %1499 = vmatprep.subr.mxu0 0.0
        %1500 = vmatpush1.msra.mxu0 0.0
        %1501 = vmatprep.subr.mxu0 0.0
        %1502 = vmatpush1.msra.mxu0 0.0
        %1503 = vmatprep.subr.mxu0 0.0
        %1504 = vmatpush1.msra.mxu0 0.0
        %1505 = vmatprep.subr.mxu0 0.0
        %1506 = vmatpush1.msra.mxu0 0.0
        %1507 = vmatprep.subr.mxu0 0.0
        %1508 = vmatpush1.msra.mxu0 0.0
        %1509 = vmatprep.subr.mxu0 0.0
        %1510 = vmatpush1.msra.mxu0 0.0
        %1511 = vmatprep.subr.mxu0 0.0
        %1512 = vmatpush1.msra.mxu0 0.0
        %1513 = vmatprep.subr.mxu0 0.0
        %1514 = vmatpush1.msra.mxu0 0.0
        %1515 = vmatprep.subr.mxu0 0.0
        %1516 = vmatpush1.msra.mxu0 0.0
        %1517 = vmatprep.subr.mxu0 0.0
        %1518 = vmatpush1.msra.mxu0 0.0
        %1519 = vmatprep.subr.mxu0 0.0
        %1520 = vmatpush1.msra.mxu0 0.0
        %1521 = vmatprep.subr.mxu0 0.0
        %1522 = vmatpush1.msra.mxu0 0.0
        %1523 = vmatprep.subr.mxu0 0.0
        %1524 = vmatpush1.msra.mxu0 0.0
        %1525 = vmatprep.subr.mxu0 0.0
        %1526 = vmatpush1.msra.mxu0 0.0
        %1527 = vmatprep.subr.mxu0 0.0
        %1528 = vmatpush1.msra.mxu0 0.0
        %1529 = vmatprep.subr.mxu0 0.0
        %1530 = vmatpush1.msra.mxu0 0.0
        %1531 = vmatprep.subr.mxu0 0.0
        %1532 = vmatpush1.msra.mxu0 0.0
        %1533 = vmatprep.subr.mxu0 0.0
        %1534 = vmatpush1.msra.mxu0 0.0
        %1535 = vmatprep.mubr.f32.mxu0 0.0
        %1536 = vmatmul.mubr.f32.gmra.mrb[0].mxu0 %v1469
        %v1537 = vpop.f32.mrb[0].mxu0
        %v1538 = vadd.f32 0.0, %v1537
        %v1539 = vpop.f32.mrb[0].mxu0
        %1540 = vdwg.mxu0
        %v1541 = vrcp.pop %v1467
        %v1542 = vmul.f32 %v1538, %v1541
        %s1543 = scalar_lea.vmem [#allocation12], 24
        %v1544 = vld [vmem:[%s1543] sm:$0xff]
        %v1546 = vsel %vm662, %v1542, 0
        %1548 = vmatprep.subr.mxu0 0.0
        %1549 = vmatpush1.msra.mxu0 %v1544
        %1550 = vmatprep.subr.mxu0 0.0
        %1551 = vmatpush1.msra.mxu0 0.0
        %1552 = vmatprep.subr.mxu0 0.0
        %1553 = vmatpush1.msra.mxu0 0.0
        %1554 = vmatprep.subr.mxu0 0.0
        %1555 = vmatpush1.msra.mxu0 0.0
        %1556 = vmatprep.subr.mxu0 0.0
        %1557 = vmatpush1.msra.mxu0 0.0
        %1558 = vmatprep.subr.mxu0 0.0
        %1559 = vmatpush1.msra.mxu0 0.0
        %1560 = vmatprep.subr.mxu0 0.0
        %1561 = vmatpush1.msra.mxu0 0.0
        %1562 = vmatprep.subr.mxu0 0.0
        %1563 = vmatpush1.msra.mxu0 0.0
        %1564 = vmatprep.subr.mxu0 0.0
        %1565 = vmatpush1.msra.mxu0 0.0
        %1566 = vmatprep.subr.mxu0 0.0
        %1567 = vmatpush1.msra.mxu0 0.0
        %1568 = vmatprep.subr.mxu0 0.0
        %1569 = vmatpush1.msra.mxu0 0.0
        %1570 = vmatprep.subr.mxu0 0.0
        %1571 = vmatpush1.msra.mxu0 0.0
        %1572 = vmatprep.subr.mxu0 0.0
        %1573 = vmatpush1.msra.mxu0 0.0
        %1574 = vmatprep.subr.mxu0 0.0
        %1575 = vmatpush1.msra.mxu0 0.0
        %1576 = vmatprep.subr.mxu0 0.0
        %1577 = vmatpush1.msra.mxu0 0.0
        %1578 = vmatprep.subr.mxu0 0.0
        %1579 = vmatpush1.msra.mxu0 0.0
        %1580 = vmatprep.subr.mxu0 0.0
        %1581 = vmatpush1.msra.mxu0 0.0
        %1582 = vmatprep.subr.mxu0 0.0
        %1583 = vmatpush1.msra.mxu0 0.0
        %1584 = vmatprep.subr.mxu0 0.0
        %1585 = vmatpush1.msra.mxu0 0.0
        %1586 = vmatprep.subr.mxu0 0.0
        %1587 = vmatpush1.msra.mxu0 0.0
        %1588 = vmatprep.subr.mxu0 0.0
        %1589 = vmatpush1.msra.mxu0 0.0
        %1590 = vmatprep.subr.mxu0 0.0
        %1591 = vmatpush1.msra.mxu0 0.0
        %1592 = vmatprep.subr.mxu0 0.0
        %1593 = vmatpush1.msra.mxu0 0.0
        %1594 = vmatprep.subr.mxu0 0.0
        %1595 = vmatpush1.msra.mxu0 0.0
        %1596 = vmatprep.subr.mxu0 0.0
        %1597 = vmatpush1.msra.mxu0 0.0
        %1598 = vmatprep.subr.mxu0 0.0
        %1599 = vmatpush1.msra.mxu0 0.0
        %1600 = vmatprep.subr.mxu0 0.0
        %1601 = vmatpush1.msra.mxu0 0.0
        %1602 = vmatprep.subr.mxu0 0.0
        %1603 = vmatpush1.msra.mxu0 0.0
        %1604 = vmatprep.subr.mxu0 0.0
        %1605 = vmatpush1.msra.mxu0 0.0
        %1606 = vmatprep.subr.mxu0 0.0
        %1607 = vmatpush1.msra.mxu0 0.0
        %1608 = vmatprep.subr.mxu0 0.0
        %1609 = vmatpush1.msra.mxu0 0.0
        %1610 = vmatprep.subr.mxu0 0.0
        %1611 = vmatpush1.msra.mxu0 0.0
        %1612 = vmatprep.mubr.f32.mxu0 0.0
        %1613 = vmatmul.mubr.f32.gmra.mrb[0].mxu0 %v1546
        %v1614 = vpop.f32.mrb[0].mxu0
        %v1615 = vadd.f32 0.0, %v1614
        %v1616 = vpop.f32.mrb[0].mxu0
        %1617 = vdwg.mxu0
        %v1618 = vadd.f32 %v1377, %v1615
        %v1619 = vld [vmem:[%s6] sm:$0x1]
        %v1621 = vlaneseq
        %v1622 = vshrl.u32 %v1621, 7
        %v1623 = vsub.s32 0, %v1622
        %v1624 = vrot.slane %v1619, %v1623
        %v1626 = vadd.f32 %v1618, %v1624
        %1627 = vst.msk [vmem:[%s378] sm:$0xff] %vm585, %v1626
        %s1628 = sand.u32 %s212, 1
        %s1629 = scalar_lea.sflag [#allocation6], %s1628
        %s1630 = sand.u32 %s212, 1
        %s1631 = smul.addr %s1630, 8
        %s1632 = scalar_lea.vmem [#allocation13], %s1631
        // Predicated region
        $region73: #{tpu_custom_call.1} parent=47 // pred_check
          %p1633 = pneg %p222
        $region74: #{tpu_custom_call.1} parent=47 // pred_check_branch
          %1635 = sbr.rel (%p1633) target = $region76
        $region75: #{tpu_custom_call.1} parent=47 // pred_region
          %s1637 = ssub.s32 128, 128
          %1638 = vsyncadd %s1629, %s1637
          %s1639 = sadd.s32 %s31, %s30
          %s1640 = smul.addr %s1639, 128
          %s1641 = scalar_lea.hbm %s7, %s1640
          %s1643 = sshll.u32 %s1632, 4
          %s1644 = int_to_ptr.vmem [resolvable:$true] %s1643
          %1646 = dma.vmem_to_hbm [thread:$0]  %s1644, 128, %s1641, %s1629
        $region76: #{tpu_custom_call.1} parent=47 // pred_fallthru
          _
      $region48: #{tpu_custom_call.1} parent=5 // pred_fallthru
        _
      %p1647 = scmp.le.s32.totalorder 2, %s21
      // Predicated region
      $region77: #{tpu_custom_call.1} parent=5 // pred_check
        %p1648 = pneg %p1647
      $region78: #{tpu_custom_call.1} parent=5 // pred_check_branch
        %1650 = sbr.rel (%p1648) target = $region80
      $region79: #{tpu_custom_call.1} parent=5 // pred_region
        %s1651 = ssub.s32 %s21, 2
        // Predicated region
        $region81: #{tpu_custom_call.1} parent=79 // pred_check
          %p1652 = pneg %p228
        $region82: #{tpu_custom_call.1} parent=79 // pred_check_branch
          %1654 = sbr.rel (%p1652) target = $region84
        $region83: #{tpu_custom_call.1} parent=79 // pred_region
          %s1655 = sand.u32 %s213, 1
          %s1656 = scalar_lea.sflag [#allocation6], %s1655
          %s1657 = sand.u32 %s213, 1
          %s1658 = smul.addr %s1657, 8
          %s1659 = scalar_lea.vmem [#allocation13], %s1658
          %1660 = dma.done %s1656, 128
        $region84: #{tpu_custom_call.1} parent=79 // pred_fallthru
          _
      $region80: #{tpu_custom_call.1} parent=5 // pred_fallthru
        _
    $region6: #{tpu_custom_call.1} parent=1 // loop_footer
      %s25 = sadd.s32 1, %s21
    $region7: #{tpu_custom_call.1} parent=1 // loop_footer_branch
      %20 = sbr.rel target = $region3
    $region8: #{tpu_custom_call.1} parent=1 // loop_exit
      _
    %1661 = vsyncpa [#allocation5], 1
    %s1662 = scalar_lea.sflag [#allocation5], 1
    %1663 = vsyncpa %s1662, 1
    %1664 = vsyncpa [#allocation8], 1
    %1665 = vsyncpa [#allocation11], 1
    %1666 = vsyncpa [#allocation6], 1
    %s1667 = scalar_lea.sflag [#allocation6], 1
    %1668 = vsyncpa %s1667, 1

</llo_original>
